<compile_context>
chip_gen: v6e
topology: v6e:2x2x1
jax: 0.10.0
libtpu: 0.0.40
codegen_flags: <defaults>
</compile_context>

<pallas_src>
import numpy as np
import jax
import jax.numpy as jnp
from jax import lax
from jax.experimental import pallas as pl
from jax.experimental.pallas import tpu as pltpu

# ----------------------- configuration (module hyper-params) -----------------
B = 2          # batch
SEQ = 16       # input sequence length (time axis)
C_IN = 4       # n_units_in
WIN = 8        # n_units_window
HID = 32       # n_units_hidden
N_LAYERS = 2   # n_layers_hidden
D_FFN = 128    # TransformerEncoderLayer dim_feedforward (synthcity default)
LEVELS = 3     # wavelet levels J
LN_EPS = 1e-5

BW = B * WIN   # tokens per kernel invocation (all batches stacked)
BS = B * SEQ

# sym2 (== db2) analysis filters (pywt values)
DEC_LO = np.array([-0.12940952255092145, 0.22414386804185735,
                    0.836516303737469, 0.48296291314469025], dtype=np.float64)
DEC_HI = np.array([-0.48296291314469025, 0.836516303737469,
                   -0.22414386804185735, -0.12940952255092145], dtype=np.float64)


# ----------------------- DWT matrix construction (glue, numpy) ---------------
def _sym_pad_idx(n, pad_l, pad_r):
    # half-sample symmetric reflection indices (pytorch_wavelets 'symmetric')
    idx = np.arange(-pad_l, n + pad_r, dtype=np.float64)
    minx, maxx = -0.5, n - 0.5
    rng = maxx - minx
    mod = np.fmod(idx - minx, 2.0 * rng)
    mod = np.where(mod < 0, mod + 2.0 * rng, mod)
    out = np.where(mod >= rng, 2.0 * rng - mod, mod) + minx
    return np.round(out).astype(np.int64)


def _afb1d_symmetric(x, h0, h1):
    # single-level analysis filter bank along last axis (mode='symmetric')
    n = x.shape[-1]
    lf = len(h0)
    outsize = (n + lf - 1) // 2
    p = 2 * (outsize - 1) - n + lf
    idx = _sym_pad_idx(n, p // 2, (p + 1) // 2)
    xp = x[..., idx]
    h0r, h1r = h0[::-1], h1[::-1]        # pytorch_wavelets flips filters for conv
    lo = np.zeros(x.shape[:-1] + (outsize,), dtype=np.float64)
    hi = np.zeros_like(lo)
    for m in range(outsize):
        seg = xp[..., 2 * m:2 * m + lf]
        lo[..., m] = seg @ h0r
        hi[..., m] = seg @ h1r
    return lo, hi


def build_dwt_concat_matrix(length, levels):
    # J-level DWT + concat([low]+highs) is linear along time: dwt_concat(x) == x @ D
    lo = np.eye(length, dtype=np.float64)
    highs = []
    for _ in range(levels):
        lo, hi = _afb1d_symmetric(lo, DEC_LO, DEC_HI)
        highs.append(hi)
    d = np.concatenate([lo] + highs, axis=-1)     # (length, T)
    return d.astype(np.float32)


D_MAT = build_dwt_concat_matrix(SEQ, LEVELS)
T_COEF = D_MAT.shape[-1]                          # 4 + 9 + 6 + 4 = 23 for SEQ=16


# ----------------------- slab layout constants --------------------------------
# fe slab (BW, 192) f32 lane layout (every block inside one 128-lane tile):
#   [0:32)   dblk (BW, BS)        folded DWT+normalizer block-diagonal^T
#   [32:64)  bfold (BW, HID)      folded normalizer+embedding bias
#   [64:80)  mask (BW, BW)        block-diagonal attention mask (0 / -1e30)
#   [80:112) Wi rows 0:C_IN       embedding weight (C_IN, HID), rest zero
#   [128:160) gamma_final (broadcast to BW rows)
#   [160:192) beta_final  (broadcast to BW rows)
FE_LANES = 192

# w slab (L, 128, 128) bf16 row layout (all blocks at lane offset 0):
#   rows [0:32)    wqkv (HID, 3H) in lanes [0:96)
#   rows [32:64)   wo   (HID, HID) in lanes [0:32)
#   rows [64:96)   w1   (HID, FFN)
#   rows [96:128)  w2^T (HID, FFN)   (used via NT dot_general)
#
# b slab (L, BW, 512) f32 lane layout, every vector pre-broadcast to BW rows:
#   [0:96) bqkv | [128:256) b1 | [256:288) bo | [288:320) b2
#   [320:352) g1 | [352:384) be1 | [384:416) g2 | [416:448) be2
B_LANES = 512


# ----------------------- single fused Pallas kernel --------------------------
def _wavelet_kernel(x_ref, fe_ref, w_ref, b_ref, o_ref):
    # x_ref:  (B*SEQ, C_IN) f32   raw input, both batches stacked along time
    # fe_ref: (BW, 192)     f32   front-end slab (see layout above)
    # w_ref:  (L, 128, 128) bf16  per-layer transformer weight slab
    # b_ref:  (L, BW, 512)  f32   per-layer bias / LayerNorm slab
    # o_ref:  (BW, HID)     f32   output tokens (reshaped outside)

    x = x_ref[...]                                                    # (BS, C)
    fe = fe_ref[...]                                                  # (BW, 192)

    dblk = fe[:, 0:BS]                                                # (BW, BS)
    bfold = fe[:, 32:64]                                              # (BW, HID)
    neg = fe[:, 64:64 + BW]                                           # (BW, BW)
    gf = fe[:, 128:160]
    bf = fe[:, 160:192]

    # ---- front end: x @ Wi as C_IN f32 broadcast-FMAs on the VPU ----
    xw = x[:, 0:1] * fe[0:1, 80:112]                                  # (BS, HID)
    for c in range(1, C_IN):
        xw = xw + x[:, c:c + 1] * fe[c:c + 1, 80:112]
    # single well-shaped MXU step, kept in f32 (precision-sensitive, tiny)
    h = jnp.dot(dblk, xw, preferred_element_type=jnp.float32) + bfold  # (BW, HID)

    scale = jnp.float32(1.0 / np.sqrt(HID))

    def layer_norm(v, g, b):
        # single-pass: E[x] and E[x^2] issued back-to-back, var = E[x^2]-mu^2
        mu = jnp.mean(v, axis=-1, keepdims=True)
        m2 = jnp.mean(v * v, axis=-1, keepdims=True)
        return (v - mu) * lax.rsqrt(m2 - mu * mu + LN_EPS) * g + b

    for l in range(N_LAYERS):          # static unroll, n_layers_hidden = 2
        w = w_ref[l]                                                  # (128,128) bf16
        bb = b_ref[l]                                                 # (BW, 512) f32
        wqkv = w[0:32, 0:96]
        wo = w[32:64, 0:HID]
        w1 = w[64:96, :]
        w2t = w[96:128, :]
        bqkv = bb[:, 0:96]
        b1 = bb[:, 128:256]
        bo = bb[:, 256:288]
        b2 = bb[:, 288:320]
        g1 = bb[:, 320:352]
        be1 = bb[:, 352:384]
        g2 = bb[:, 384:416]
        be2 = bb[:, 416:448]

        # fused Q/K/V projection: one (BW, HID) @ (HID, 3H) matmul, then slice
        qkv = (jnp.dot(h.astype(jnp.bfloat16), wqkv,
                       preferred_element_type=jnp.float32) + bqkv)    # (BW, 3H)
        q = qkv[:, 0:HID]
        k = qkv[:, HID:2 * HID]
        v = qkv[:, 2 * HID:3 * HID]

        # single-head attention over all B*WIN tokens, block-diagonal mask.
        # Max-free softmax: logits are O(1) here and the -1e30 mask entries
        # exp-underflow to exactly 0, so the row-max subtraction is skipped.
        scores = lax.dot_general(
            q.astype(jnp.bfloat16), k.astype(jnp.bfloat16),
            (((1,), (1,)), ((), ())),
            preferred_element_type=jnp.float32) * scale + neg         # (BW, BW)
        p = jnp.exp(scores)
        attn = p * pl.reciprocal(jnp.sum(p, axis=-1, keepdims=True), approx=True)
        sa = jnp.dot(attn.astype(jnp.bfloat16), v.astype(jnp.bfloat16),
                     preferred_element_type=jnp.float32)              # (BW, HID)
        sa = jnp.dot(sa.astype(jnp.bfloat16), wo,
                     preferred_element_type=jnp.float32) + bo
        h = layer_norm(h + sa, g1, be1)

        # feed-forward (relu); second matmul contracts against w2^T (NT form)
        ff = jnp.maximum(
            jnp.dot(h.astype(jnp.bfloat16), w1,
                    preferred_element_type=jnp.float32) + b1, 0.0)    # (BW, FFN)
        ff = lax.dot_general(
            ff.astype(jnp.bfloat16), w2t,
            (((1,), (1,)), ((), ())),
            preferred_element_type=jnp.float32) + b2                  # (BW, HID)
        h = layer_norm(h + ff, g2, be2)

    h = layer_norm(h, gf, bf)                                         # (BW, HID)
    o_ref[...] = h                         # plain 2-D store; reshape in wrapper


# ----------------------- wrapper ----------------------------------------------
_VMEM_SPEC = pl.BlockSpec(memory_space=pltpu.MemorySpace.VMEM)


@jax.jit
def wavelet_forward(x, fp):
    # x: (B, SEQ, C_IN) f32 ; fp: packed kernel parameter slabs
    x_flat = x.reshape(B * SEQ, C_IN)       # contiguous view, no data movement
    out = pl.pallas_call(
        _wavelet_kernel,
        out_shape=jax.ShapeDtypeStruct((BW, HID), jnp.float32),
        in_specs=[_VMEM_SPEC] * 4,
        out_specs=_VMEM_SPEC,
    )(x_flat, fp['fe'], fp['w'], fp['b'])
    return out.reshape(B, WIN, HID)         # leading-dim split only (free)


# ----------------------- host-side folding / packing of the parameters --------
def fold_params(p):
    # Fold DWT matrix + normalizer Linear:  Dwn = D @ WnT  -> (SEQ, WIN)
    dwn_t = (p['D'] @ p['wnT']).T                               # (WIN, SEQ)
    dblk = jnp.kron(jnp.eye(B, dtype=jnp.float32), dwn_t)       # (BW, BS) block-diag
    # Fold normalizer bias through the embedding Linear:
    #   bias_fold[w,:] = bn[w] * sum_c Wi[c,:] + bi
    bias_fold = jnp.outer(p['bn'].reshape(-1), jnp.sum(p['wiT'], axis=0)) + p['bi']
    bfold = jnp.tile(bias_fold, (B, 1))                         # (BW, HID)
    # Block-diagonal attention mask (keeps the two batches independent).
    bid = jnp.repeat(jnp.arange(B), WIN)
    mask = jnp.where(bid[:, None] == bid[None, :], 0.0, -1e30).astype(jnp.float32)

    # ---- f32 front-end slab ----
    fe = jnp.zeros((BW, FE_LANES), jnp.float32)
    fe = fe.at[:, 0:BS].set(dblk)
    fe = fe.at[:, 32:64].set(bfold)
    fe = fe.at[:, 64:64 + BW].set(mask)
    fe = fe.at[0:C_IN, 80:112].set(p['wiT'])
    fe = fe.at[:, 128:160].set(jnp.tile(p['gf'], (BW, 1)))
    fe = fe.at[:, 160:192].set(jnp.tile(p['bf'], (BW, 1)))

    # ---- bf16 per-layer weight slab ----
    wqkv = jnp.concatenate([p['wqT'], p['wkT'], p['wvT']], axis=-1)   # (L, 32, 96)
    wslab = jnp.zeros((N_LAYERS, 128, 128), jnp.float32)
    wslab = wslab.at[:, 0:32, 0:96].set(wqkv)
    wslab = wslab.at[:, 32:64, 0:HID].set(p['woT'])
    wslab = wslab.at[:, 64:96, :].set(p['w1T'])
    wslab = wslab.at[:, 96:128, :].set(jnp.transpose(p['w2T'], (0, 2, 1)))
    wslab = wslab.astype(jnp.bfloat16)

    # ---- f32 per-layer bias / LayerNorm slab, pre-broadcast to BW rows ----
    bqkv = jnp.concatenate([p['bq'], p['bk'], p['bv']], axis=-1)      # (L, 1, 96)
    bslab = jnp.zeros((N_LAYERS, BW, B_LANES), jnp.float32)
    bslab = bslab.at[:, :, 0:96].set(jnp.tile(bqkv, (1, BW, 1)))
    bslab = bslab.at[:, :, 128:256].set(jnp.tile(p['b1'], (1, BW, 1)))
    bslab = bslab.at[:, :, 256:288].set(jnp.tile(p['bo'], (1, BW, 1)))
    bslab = bslab.at[:, :, 288:320].set(jnp.tile(p['b2'], (1, BW, 1)))
    bslab = bslab.at[:, :, 320:352].set(jnp.tile(p['g1'], (1, BW, 1)))
    bslab = bslab.at[:, :, 352:384].set(jnp.tile(p['be1'], (1, BW, 1)))
    bslab = bslab.at[:, :, 384:416].set(jnp.tile(p['g2'], (1, BW, 1)))
    bslab = bslab.at[:, :, 416:448].set(jnp.tile(p['be2'], (1, BW, 1)))

    return {'fe': fe, 'w': wslab, 'b': bslab}


# ----------------------- plain-JAX reference (f32, unfused) -------------------
def _layer_norm_ref(h, g, b):
    mu = jnp.mean(h, axis=-1, keepdims=True)
    var = jnp.mean((h - mu) ** 2, axis=-1, keepdims=True)
    return (h - mu) * lax.rsqrt(var + LN_EPS) * g + b


def reference_forward(x, p):
    xp = jnp.transpose(x, (0, 2, 1))
    normed = jnp.einsum('bcl,lt->bct', xp, p['D']) @ p['wnT'] + p['bn']
    h = jnp.transpose(normed, (0, 2, 1)) @ p['wiT'] + p['bi']
    scale = 1.0 / np.sqrt(HID)
    for l in range(N_LAYERS):
        q = h @ p['wqT'][l] + p['bq'][l]
        k = h @ p['wkT'][l] + p['bk'][l]
        v = h @ p['wvT'][l] + p['bv'][l]
        s = jnp.einsum('bqh,bkh->bqk', q, k) * scale
        a = jax.nn.softmax(s, axis=-1)
        sa = jnp.einsum('bqk,bkh->bqh', a, v) @ p['woT'][l] + p['bo'][l]
        h = _layer_norm_ref(h + sa, p['g1'][l], p['be1'][l])
        ff = jax.nn.relu(h @ p['w1T'][l] + p['b1'][l]) @ p['w2T'][l] + p['b2'][l]
        h = _layer_norm_ref(h + ff, p['g2'][l], p['be2'][l])
    return _layer_norm_ref(h, p['gf'], p['bf'])


# ----------------------- deterministic parameter init -------------------------
def init_params(key):
    keys = iter(jax.random.split(key, 64))

    def rnd(shape, scale=0.1):
        return jax.random.normal(next(keys), shape, jnp.float32) * scale

    p = {'D': jnp.asarray(D_MAT)}
    # lazily-created normalizer: Linear(T_COEF, WIN)   (stored transposed)
    p['wnT'] = rnd((T_COEF, WIN))
    p['bn'] = rnd((1, WIN))
    # TransformerModel input linear: Linear(C_IN, HID)
    p['wiT'] = rnd((C_IN, HID))
    p['bi'] = rnd((1, HID))

    def stack(shape, scale=0.1):
        return jnp.stack([rnd(shape, scale) for _ in range(N_LAYERS)], axis=0)

    # per-layer attention (1 head), FFN, layer norms (all stored transposed)
    p['wqT'] = stack((HID, HID));   p['bq'] = stack((1, HID))
    p['wkT'] = stack((HID, HID));   p['bk'] = stack((1, HID))
    p['wvT'] = stack((HID, HID));   p['bv'] = stack((1, HID))
    p['woT'] = stack((HID, HID));   p['bo'] = stack((1, HID))
    p['w1T'] = stack((HID, D_FFN)); p['b1'] = stack((1, D_FFN))
    p['w2T'] = stack((D_FFN, HID)); p['b2'] = stack((1, HID))
    p['g1'] = 1.0 + stack((1, HID), 0.01); p['be1'] = stack((1, HID), 0.01)
    p['g2'] = 1.0 + stack((1, HID), 0.01); p['be2'] = stack((1, HID), 0.01)
    # final encoder norm
    p['gf'] = 1.0 + rnd((1, HID), 0.01);   p['bf'] = rnd((1, HID), 0.01)
    return p


# TODO(synk): dropout is a no-op here (the Wavelet module passes dropout=0 and
# this is the inference path), so no stochastic masking is implemented; the
# DWT1DInverse decoder is not used by forward() and is not implemented.

if __name__ == "__main__":
    key = jax.random.PRNGKey(0)
    kx, kp = jax.random.split(key)
    x = jax.random.normal(kx, (B, SEQ, C_IN), jnp.float32)
    params = init_params(kp)
    fparams = fold_params(params)

    out = jax.block_until_ready(wavelet_forward(x, fparams))
    ref = jax.block_until_ready(reference_forward(x, params))

    assert out.shape == (B, WIN, HID), out.shape
    # Transformer-body weights are bf16 on the MXU and the softmax uses the
    # approx reciprocal; the (precision-sensitive) wavelet front end is full
    # f32, so the tolerance below is comfortably met.
    np.testing.assert_allclose(np.asarray(out), np.asarray(ref),
                               rtol=3e-2, atol=3e-2)
    print("KERNEL_OK")
</pallas_src>

<mosaic_0001>
module attributes {stable_mosaic.version = 11 : i64} {
  func.func @_wavelet_kernel(%arg0: memref<32x4xf32, #tpu.memory_space<vmem>>, %arg1: memref<16x192xf32, #tpu.memory_space<vmem>>, %arg2: memref<2x128x128xbf16, #tpu.memory_space<vmem>>, %arg3: memref<2x16x512xf32, #tpu.memory_space<vmem>>, %arg4: memref<16x32xf32, #tpu.memory_space<vmem>>) attributes {dimension_semantics = [], scalar_prefetch = 0 : i64, scratch_operands = 0 : i64, tpu.core_type = #tpu.core_type<tc>} {
    %c0 = arith.constant 0 : index
    %c0_0 = arith.constant 0 : index
    %0 = vector.load %arg0[%c0, %c0_0] : memref<32x4xf32, #tpu.memory_space<vmem>>, vector<32x4xf32>
    %c0_1 = arith.constant 0 : index
    %c0_2 = arith.constant 0 : index
    %1 = vector.load %arg1[%c0_1, %c0_2] : memref<16x192xf32, #tpu.memory_space<vmem>>, vector<16x192xf32>
    %2 = vector.extract_strided_slice %1 {offsets = [0, 0], sizes = [16, 32], strides = [1, 1]} : vector<16x192xf32> to vector<16x32xf32>
    %3 = vector.extract_strided_slice %1 {offsets = [0, 32], sizes = [16, 32], strides = [1, 1]} : vector<16x192xf32> to vector<16x32xf32>
    %4 = vector.extract_strided_slice %1 {offsets = [0, 64], sizes = [16, 16], strides = [1, 1]} : vector<16x192xf32> to vector<16x16xf32>
    %5 = vector.extract_strided_slice %1 {offsets = [0, 128], sizes = [16, 32], strides = [1, 1]} : vector<16x192xf32> to vector<16x32xf32>
    %6 = vector.extract_strided_slice %1 {offsets = [0, 160], sizes = [16, 32], strides = [1, 1]} : vector<16x192xf32> to vector<16x32xf32>
    %7 = vector.extract_strided_slice %0 {offsets = [0, 0], sizes = [32, 1], strides = [1, 1]} : vector<32x4xf32> to vector<32x1xf32>
    %8 = vector.extract_strided_slice %1 {offsets = [0, 80], sizes = [1, 32], strides = [1, 1]} : vector<16x192xf32> to vector<1x32xf32>
    %9 = vector.broadcast %7 : vector<32x1xf32> to vector<32x32xf32>
    %10 = vector.broadcast %8 : vector<1x32xf32> to vector<32x32xf32>
    %11 = arith.mulf %9, %10 : vector<32x32xf32>
    %12 = vector.extract_strided_slice %0 {offsets = [0, 1], sizes = [32, 1], strides = [1, 1]} : vector<32x4xf32> to vector<32x1xf32>
    %13 = vector.extract_strided_slice %1 {offsets = [1, 80], sizes = [1, 32], strides = [1, 1]} : vector<16x192xf32> to vector<1x32xf32>
    %14 = vector.broadcast %12 : vector<32x1xf32> to vector<32x32xf32>
    %15 = vector.broadcast %13 : vector<1x32xf32> to vector<32x32xf32>
    %16 = arith.mulf %14, %15 : vector<32x32xf32>
    %17 = arith.addf %11, %16 : vector<32x32xf32>
    %18 = vector.extract_strided_slice %0 {offsets = [0, 2], sizes = [32, 1], strides = [1, 1]} : vector<32x4xf32> to vector<32x1xf32>
    %19 = vector.extract_strided_slice %1 {offsets = [2, 80], sizes = [1, 32], strides = [1, 1]} : vector<16x192xf32> to vector<1x32xf32>
    %20 = vector.broadcast %18 : vector<32x1xf32> to vector<32x32xf32>
    %21 = vector.broadcast %19 : vector<1x32xf32> to vector<32x32xf32>
    %22 = arith.mulf %20, %21 : vector<32x32xf32>
    %23 = arith.addf %17, %22 : vector<32x32xf32>
    %24 = vector.extract_strided_slice %0 {offsets = [0, 3], sizes = [32, 1], strides = [1, 1]} : vector<32x4xf32> to vector<32x1xf32>
    %25 = vector.extract_strided_slice %1 {offsets = [3, 80], sizes = [1, 32], strides = [1, 1]} : vector<16x192xf32> to vector<1x32xf32>
    %26 = vector.broadcast %24 : vector<32x1xf32> to vector<32x32xf32>
    %27 = vector.broadcast %25 : vector<1x32xf32> to vector<32x32xf32>
    %28 = arith.mulf %26, %27 : vector<32x32xf32>
    %29 = arith.addf %23, %28 : vector<32x32xf32>
    %cst = arith.constant dense<0.000000e+00> : vector<16x32xf32>
    %30 = tpu.matmul %2, %29, %cst {dimension_numbers = #tpu.dot_dimension_numbers<[1], [0], [0], [1], [0, 0, 1, 1], [], []>} : vector<16x32xf32>, vector<32x32xf32>, vector<16x32xf32> -> vector<16x32xf32>
    %31 = arith.addf %30, %3 : vector<16x32xf32>
    %c0_3 = arith.constant 0 : index
    %c0_4 = arith.constant 0 : index
    %c0_5 = arith.constant 0 : index
    %32 = vector.load %arg2[%c0_3, %c0_4, %c0_5] : memref<2x128x128xbf16, #tpu.memory_space<vmem>>, vector<1x128x128xbf16>
    %33 = vector.shape_cast %32 : vector<1x128x128xbf16> to vector<128x128xbf16>
    %c0_6 = arith.constant 0 : index
    %c0_7 = arith.constant 0 : index
    %c0_8 = arith.constant 0 : index
    %34 = vector.load %arg3[%c0_6, %c0_7, %c0_8] : memref<2x16x512xf32, #tpu.memory_space<vmem>>, vector<1x16x512xf32>
    %35 = vector.shape_cast %34 : vector<1x16x512xf32> to vector<16x512xf32>
    %36 = vector.extract_strided_slice %33 {offsets = [0, 0], sizes = [32, 96], strides = [1, 1]} : vector<128x128xbf16> to vector<32x96xbf16>
    %37 = vector.extract_strided_slice %33 {offsets = [32, 0], sizes = [32, 32], strides = [1, 1]} : vector<128x128xbf16> to vector<32x32xbf16>
    %38 = vector.extract_strided_slice %33 {offsets = [64, 0], sizes = [32, 128], strides = [1, 1]} : vector<128x128xbf16> to vector<32x128xbf16>
    %39 = vector.extract_strided_slice %33 {offsets = [96, 0], sizes = [32, 128], strides = [1, 1]} : vector<128x128xbf16> to vector<32x128xbf16>
    %40 = vector.extract_strided_slice %35 {offsets = [0, 0], sizes = [16, 96], strides = [1, 1]} : vector<16x512xf32> to vector<16x96xf32>
    %41 = vector.extract_strided_slice %35 {offsets = [0, 128], sizes = [16, 128], strides = [1, 1]} : vector<16x512xf32> to vector<16x128xf32>
    %42 = vector.extract_strided_slice %35 {offsets = [0, 256], sizes = [16, 32], strides = [1, 1]} : vector<16x512xf32> to vector<16x32xf32>
    %43 = vector.extract_strided_slice %35 {offsets = [0, 288], sizes = [16, 32], strides = [1, 1]} : vector<16x512xf32> to vector<16x32xf32>
    %44 = vector.extract_strided_slice %35 {offsets = [0, 320], sizes = [16, 32], strides = [1, 1]} : vector<16x512xf32> to vector<16x32xf32>
    %45 = vector.extract_strided_slice %35 {offsets = [0, 352], sizes = [16, 32], strides = [1, 1]} : vector<16x512xf32> to vector<16x32xf32>
    %46 = vector.extract_strided_slice %35 {offsets = [0, 384], sizes = [16, 32], strides = [1, 1]} : vector<16x512xf32> to vector<16x32xf32>
    %47 = vector.extract_strided_slice %35 {offsets = [0, 416], sizes = [16, 32], strides = [1, 1]} : vector<16x512xf32> to vector<16x32xf32>
    %48 = arith.truncf %31 : vector<16x32xf32> to vector<16x32xbf16>
    %cst_9 = arith.constant dense<0.000000e+00> : vector<16x96xf32>
    %49 = tpu.matmul %48, %36, %cst_9 {dimension_numbers = #tpu.dot_dimension_numbers<[1], [0], [0], [1], [0, 0, 1, 1], [], []>} : vector<16x32xbf16>, vector<32x96xbf16>, vector<16x96xf32> -> vector<16x96xf32>
    %50 = arith.addf %49, %40 : vector<16x96xf32>
    %51 = vector.extract_strided_slice %50 {offsets = [0, 0], sizes = [16, 32], strides = [1, 1]} : vector<16x96xf32> to vector<16x32xf32>
    %52 = vector.extract_strided_slice %50 {offsets = [0, 32], sizes = [16, 32], strides = [1, 1]} : vector<16x96xf32> to vector<16x32xf32>
    %53 = vector.extract_strided_slice %50 {offsets = [0, 64], sizes = [16, 32], strides = [1, 1]} : vector<16x96xf32> to vector<16x32xf32>
    %54 = arith.truncf %51 : vector<16x32xf32> to vector<16x32xbf16>
    %55 = arith.truncf %52 : vector<16x32xf32> to vector<16x32xbf16>
    %cst_10 = arith.constant dense<0.000000e+00> : vector<16x16xf32>
    %56 = tpu.matmul %54, %55, %cst_10 {dimension_numbers = #tpu.dot_dimension_numbers<[1], [1], [0], [0], [0, 0, 1, 0], [], []>} : vector<16x32xbf16>, vector<16x32xbf16>, vector<16x16xf32> -> vector<16x16xf32>
    %cst_11 = arith.constant 0.176776692 : f32
    %57 = vector.broadcast %cst_11 : f32 to vector<16x16xf32>
    %58 = arith.mulf %56, %57 : vector<16x16xf32>
    %59 = arith.addf %58, %4 : vector<16x16xf32>
    %60 = math.exp %59 : vector<16x16xf32>
    %cst_12 = arith.constant dense<0.000000e+00> : vector<16xf32>
    %61 = vector.multi_reduction <add>, %60, %cst_12 [1] : vector<16x16xf32> to vector<16xf32>
    %62 = vector.shape_cast %61 : vector<16xf32> to vector<16x1xf32>
    %63 = tpu.reciprocal %62 {approx = true} : vector<16x1xf32> -> vector<16x1xf32>
    %64 = vector.broadcast %63 : vector<16x1xf32> to vector<16x16xf32>
    %65 = arith.mulf %60, %64 : vector<16x16xf32>
    %66 = arith.truncf %65 : vector<16x16xf32> to vector<16x16xbf16>
    %67 = arith.truncf %53 : vector<16x32xf32> to vector<16x32xbf16>
    %cst_13 = arith.constant dense<0.000000e+00> : vector<16x32xf32>
    %68 = tpu.matmul %66, %67, %cst_13 {dimension_numbers = #tpu.dot_dimension_numbers<[1], [0], [0], [1], [0, 0, 1, 1], [], []>} : vector<16x16xbf16>, vector<16x32xbf16>, vector<16x32xf32> -> vector<16x32xf32>
    %69 = arith.truncf %68 : vector<16x32xf32> to vector<16x32xbf16>
    %cst_14 = arith.constant dense<0.000000e+00> : vector<16x32xf32>
    %70 = tpu.matmul %69, %37, %cst_14 {dimension_numbers = #tpu.dot_dimension_numbers<[1], [0], [0], [1], [0, 0, 1, 1], [], []>} : vector<16x32xbf16>, vector<32x32xbf16>, vector<16x32xf32> -> vector<16x32xf32>
    %71 = arith.addf %70, %42 : vector<16x32xf32>
    %72 = arith.addf %31, %71 : vector<16x32xf32>
    %cst_15 = arith.constant dense<0.000000e+00> : vector<16xf32>
    %73 = vector.multi_reduction <add>, %72, %cst_15 [1] : vector<16x32xf32> to vector<16xf32>
    %74 = vector.shape_cast %73 : vector<16xf32> to vector<16x1xf32>
    %cst_16 = arith.constant 3.200000e+01 : f32
    %75 = vector.broadcast %cst_16 : f32 to vector<16x1xf32>
    %76 = arith.divf %74, %75 : vector<16x1xf32>
    %77 = arith.mulf %72, %72 : vector<16x32xf32>
    %cst_17 = arith.constant dense<0.000000e+00> : vector<16xf32>
    %78 = vector.multi_reduction <add>, %77, %cst_17 [1] : vector<16x32xf32> to vector<16xf32>
    %79 = vector.shape_cast %78 : vector<16xf32> to vector<16x1xf32>
    %cst_18 = arith.constant 3.200000e+01 : f32
    %80 = vector.broadcast %cst_18 : f32 to vector<16x1xf32>
    %81 = arith.divf %79, %80 : vector<16x1xf32>
    %82 = vector.broadcast %76 : vector<16x1xf32> to vector<16x32xf32>
    %83 = arith.subf %72, %82 : vector<16x32xf32>
    %84 = arith.mulf %76, %76 : vector<16x1xf32>
    %85 = arith.subf %81, %84 : vector<16x1xf32>
    %cst_19 = arith.constant 9.99999974E-6 : f32
    %86 = vector.broadcast %cst_19 : f32 to vector<16x1xf32>
    %87 = arith.addf %85, %86 : vector<16x1xf32>
    %88 = math.rsqrt %87 : vector<16x1xf32>
    %89 = vector.broadcast %88 : vector<16x1xf32> to vector<16x32xf32>
    %90 = arith.mulf %83, %89 : vector<16x32xf32>
    %91 = arith.mulf %90, %44 : vector<16x32xf32>
    %92 = arith.addf %91, %45 : vector<16x32xf32>
    %93 = arith.truncf %92 : vector<16x32xf32> to vector<16x32xbf16>
    %cst_20 = arith.constant dense<0.000000e+00> : vector<16x128xf32>
    %94 = tpu.matmul %93, %38, %cst_20 {dimension_numbers = #tpu.dot_dimension_numbers<[1], [0], [0], [1], [0, 0, 1, 1], [], []>} : vector<16x32xbf16>, vector<32x128xbf16>, vector<16x128xf32> -> vector<16x128xf32>
    %95 = arith.addf %94, %41 : vector<16x128xf32>
    %cst_21 = arith.constant 0.000000e+00 : f32
    %96 = vector.broadcast %cst_21 : f32 to vector<16x128xf32>
    %97 = arith.maximumf %95, %96 : vector<16x128xf32>
    %98 = arith.truncf %97 : vector<16x128xf32> to vector<16x128xbf16>
    %cst_22 = arith.constant dense<0.000000e+00> : vector<16x32xf32>
    %99 = tpu.matmul %98, %39, %cst_22 {dimension_numbers = #tpu.dot_dimension_numbers<[1], [1], [0], [0], [0, 0, 1, 0], [], []>} : vector<16x128xbf16>, vector<32x128xbf16>, vector<16x32xf32> -> vector<16x32xf32>
    %100 = arith.addf %99, %43 : vector<16x32xf32>
    %101 = arith.addf %92, %100 : vector<16x32xf32>
    %cst_23 = arith.constant dense<0.000000e+00> : vector<16xf32>
    %102 = vector.multi_reduction <add>, %101, %cst_23 [1] : vector<16x32xf32> to vector<16xf32>
    %103 = vector.shape_cast %102 : vector<16xf32> to vector<16x1xf32>
    %cst_24 = arith.constant 3.200000e+01 : f32
    %104 = vector.broadcast %cst_24 : f32 to vector<16x1xf32>
    %105 = arith.divf %103, %104 : vector<16x1xf32>
    %106 = arith.mulf %101, %101 : vector<16x32xf32>
    %cst_25 = arith.constant dense<0.000000e+00> : vector<16xf32>
    %107 = vector.multi_reduction <add>, %106, %cst_25 [1] : vector<16x32xf32> to vector<16xf32>
    %108 = vector.shape_cast %107 : vector<16xf32> to vector<16x1xf32>
    %cst_26 = arith.constant 3.200000e+01 : f32
    %109 = vector.broadcast %cst_26 : f32 to vector<16x1xf32>
    %110 = arith.divf %108, %109 : vector<16x1xf32>
    %111 = vector.broadcast %105 : vector<16x1xf32> to vector<16x32xf32>
    %112 = arith.subf %101, %111 : vector<16x32xf32>
    %113 = arith.mulf %105, %105 : vector<16x1xf32>
    %114 = arith.subf %110, %113 : vector<16x1xf32>
    %cst_27 = arith.constant 9.99999974E-6 : f32
    %115 = vector.broadcast %cst_27 : f32 to vector<16x1xf32>
    %116 = arith.addf %114, %115 : vector<16x1xf32>
    %117 = math.rsqrt %116 : vector<16x1xf32>
    %118 = vector.broadcast %117 : vector<16x1xf32> to vector<16x32xf32>
    %119 = arith.mulf %112, %118 : vector<16x32xf32>
    %120 = arith.mulf %119, %46 : vector<16x32xf32>
    %121 = arith.addf %120, %47 : vector<16x32xf32>
    %c1 = arith.constant 1 : index
    %c0_28 = arith.constant 0 : index
    %c0_29 = arith.constant 0 : index
    %122 = vector.load %arg2[%c1, %c0_28, %c0_29] : memref<2x128x128xbf16, #tpu.memory_space<vmem>>, vector<1x128x128xbf16>
    %123 = vector.shape_cast %122 : vector<1x128x128xbf16> to vector<128x128xbf16>
    %c1_30 = arith.constant 1 : index
    %c0_31 = arith.constant 0 : index
    %c0_32 = arith.constant 0 : index
    %124 = vector.load %arg3[%c1_30, %c0_31, %c0_32] : memref<2x16x512xf32, #tpu.memory_space<vmem>>, vector<1x16x512xf32>
    %125 = vector.shape_cast %124 : vector<1x16x512xf32> to vector<16x512xf32>
    %126 = vector.extract_strided_slice %123 {offsets = [0, 0], sizes = [32, 96], strides = [1, 1]} : vector<128x128xbf16> to vector<32x96xbf16>
    %127 = vector.extract_strided_slice %123 {offsets = [32, 0], sizes = [32, 32], strides = [1, 1]} : vector<128x128xbf16> to vector<32x32xbf16>
    %128 = vector.extract_strided_slice %123 {offsets = [64, 0], sizes = [32, 128], strides = [1, 1]} : vector<128x128xbf16> to vector<32x128xbf16>
    %129 = vector.extract_strided_slice %123 {offsets = [96, 0], sizes = [32, 128], strides = [1, 1]} : vector<128x128xbf16> to vector<32x128xbf16>
    %130 = vector.extract_strided_slice %125 {offsets = [0, 0], sizes = [16, 96], strides = [1, 1]} : vector<16x512xf32> to vector<16x96xf32>
    %131 = vector.extract_strided_slice %125 {offsets = [0, 128], sizes = [16, 128], strides = [1, 1]} : vector<16x512xf32> to vector<16x128xf32>
    %132 = vector.extract_strided_slice %125 {offsets = [0, 256], sizes = [16, 32], strides = [1, 1]} : vector<16x512xf32> to vector<16x32xf32>
    %133 = vector.extract_strided_slice %125 {offsets = [0, 288], sizes = [16, 32], strides = [1, 1]} : vector<16x512xf32> to vector<16x32xf32>
    %134 = vector.extract_strided_slice %125 {offsets = [0, 320], sizes = [16, 32], strides = [1, 1]} : vector<16x512xf32> to vector<16x32xf32>
    %135 = vector.extract_strided_slice %125 {offsets = [0, 352], sizes = [16, 32], strides = [1, 1]} : vector<16x512xf32> to vector<16x32xf32>
    %136 = vector.extract_strided_slice %125 {offsets = [0, 384], sizes = [16, 32], strides = [1, 1]} : vector<16x512xf32> to vector<16x32xf32>
    %137 = vector.extract_strided_slice %125 {offsets = [0, 416], sizes = [16, 32], strides = [1, 1]} : vector<16x512xf32> to vector<16x32xf32>
    %138 = arith.truncf %121 : vector<16x32xf32> to vector<16x32xbf16>
    %cst_33 = arith.constant dense<0.000000e+00> : vector<16x96xf32>
    %139 = tpu.matmul %138, %126, %cst_33 {dimension_numbers = #tpu.dot_dimension_numbers<[1], [0], [0], [1], [0, 0, 1, 1], [], []>} : vector<16x32xbf16>, vector<32x96xbf16>, vector<16x96xf32> -> vector<16x96xf32>
    %140 = arith.addf %139, %130 : vector<16x96xf32>
    %141 = vector.extract_strided_slice %140 {offsets = [0, 0], sizes = [16, 32], strides = [1, 1]} : vector<16x96xf32> to vector<16x32xf32>
    %142 = vector.extract_strided_slice %140 {offsets = [0, 32], sizes = [16, 32], strides = [1, 1]} : vector<16x96xf32> to vector<16x32xf32>
    %143 = vector.extract_strided_slice %140 {offsets = [0, 64], sizes = [16, 32], strides = [1, 1]} : vector<16x96xf32> to vector<16x32xf32>
    %144 = arith.truncf %141 : vector<16x32xf32> to vector<16x32xbf16>
    %145 = arith.truncf %142 : vector<16x32xf32> to vector<16x32xbf16>
    %cst_34 = arith.constant dense<0.000000e+00> : vector<16x16xf32>
    %146 = tpu.matmul %144, %145, %cst_34 {dimension_numbers = #tpu.dot_dimension_numbers<[1], [1], [0], [0], [0, 0, 1, 0], [], []>} : vector<16x32xbf16>, vector<16x32xbf16>, vector<16x16xf32> -> vector<16x16xf32>
    %cst_35 = arith.constant 0.176776692 : f32
    %147 = vector.broadcast %cst_35 : f32 to vector<16x16xf32>
    %148 = arith.mulf %146, %147 : vector<16x16xf32>
    %149 = arith.addf %148, %4 : vector<16x16xf32>
    %150 = math.exp %149 : vector<16x16xf32>
    %cst_36 = arith.constant dense<0.000000e+00> : vector<16xf32>
    %151 = vector.multi_reduction <add>, %150, %cst_36 [1] : vector<16x16xf32> to vector<16xf32>
    %152 = vector.shape_cast %151 : vector<16xf32> to vector<16x1xf32>
    %153 = tpu.reciprocal %152 {approx = true} : vector<16x1xf32> -> vector<16x1xf32>
    %154 = vector.broadcast %153 : vector<16x1xf32> to vector<16x16xf32>
    %155 = arith.mulf %150, %154 : vector<16x16xf32>
    %156 = arith.truncf %155 : vector<16x16xf32> to vector<16x16xbf16>
    %157 = arith.truncf %143 : vector<16x32xf32> to vector<16x32xbf16>
    %cst_37 = arith.constant dense<0.000000e+00> : vector<16x32xf32>
    %158 = tpu.matmul %156, %157, %cst_37 {dimension_numbers = #tpu.dot_dimension_numbers<[1], [0], [0], [1], [0, 0, 1, 1], [], []>} : vector<16x16xbf16>, vector<16x32xbf16>, vector<16x32xf32> -> vector<16x32xf32>
    %159 = arith.truncf %158 : vector<16x32xf32> to vector<16x32xbf16>
    %cst_38 = arith.constant dense<0.000000e+00> : vector<16x32xf32>
    %160 = tpu.matmul %159, %127, %cst_38 {dimension_numbers = #tpu.dot_dimension_numbers<[1], [0], [0], [1], [0, 0, 1, 1], [], []>} : vector<16x32xbf16>, vector<32x32xbf16>, vector<16x32xf32> -> vector<16x32xf32>
    %161 = arith.addf %160, %132 : vector<16x32xf32>
    %162 = arith.addf %121, %161 : vector<16x32xf32>
    %cst_39 = arith.constant dense<0.000000e+00> : vector<16xf32>
    %163 = vector.multi_reduction <add>, %162, %cst_39 [1] : vector<16x32xf32> to vector<16xf32>
    %164 = vector.shape_cast %163 : vector<16xf32> to vector<16x1xf32>
    %cst_40 = arith.constant 3.200000e+01 : f32
    %165 = vector.broadcast %cst_40 : f32 to vector<16x1xf32>
    %166 = arith.divf %164, %165 : vector<16x1xf32>
    %167 = arith.mulf %162, %162 : vector<16x32xf32>
    %cst_41 = arith.constant dense<0.000000e+00> : vector<16xf32>
    %168 = vector.multi_reduction <add>, %167, %cst_41 [1] : vector<16x32xf32> to vector<16xf32>
    %169 = vector.shape_cast %168 : vector<16xf32> to vector<16x1xf32>
    %cst_42 = arith.constant 3.200000e+01 : f32
    %170 = vector.broadcast %cst_42 : f32 to vector<16x1xf32>
    %171 = arith.divf %169, %170 : vector<16x1xf32>
    %172 = vector.broadcast %166 : vector<16x1xf32> to vector<16x32xf32>
    %173 = arith.subf %162, %172 : vector<16x32xf32>
    %174 = arith.mulf %166, %166 : vector<16x1xf32>
    %175 = arith.subf %171, %174 : vector<16x1xf32>
    %cst_43 = arith.constant 9.99999974E-6 : f32
    %176 = vector.broadcast %cst_43 : f32 to vector<16x1xf32>
    %177 = arith.addf %175, %176 : vector<16x1xf32>
    %178 = math.rsqrt %177 : vector<16x1xf32>
    %179 = vector.broadcast %178 : vector<16x1xf32> to vector<16x32xf32>
    %180 = arith.mulf %173, %179 : vector<16x32xf32>
    %181 = arith.mulf %180, %134 : vector<16x32xf32>
    %182 = arith.addf %181, %135 : vector<16x32xf32>
    %183 = arith.truncf %182 : vector<16x32xf32> to vector<16x32xbf16>
    %cst_44 = arith.constant dense<0.000000e+00> : vector<16x128xf32>
    %184 = tpu.matmul %183, %128, %cst_44 {dimension_numbers = #tpu.dot_dimension_numbers<[1], [0], [0], [1], [0, 0, 1, 1], [], []>} : vector<16x32xbf16>, vector<32x128xbf16>, vector<16x128xf32> -> vector<16x128xf32>
    %185 = arith.addf %184, %131 : vector<16x128xf32>
    %cst_45 = arith.constant 0.000000e+00 : f32
    %186 = vector.broadcast %cst_45 : f32 to vector<16x128xf32>
    %187 = arith.maximumf %185, %186 : vector<16x128xf32>
    %188 = arith.truncf %187 : vector<16x128xf32> to vector<16x128xbf16>
    %cst_46 = arith.constant dense<0.000000e+00> : vector<16x32xf32>
    %189 = tpu.matmul %188, %129, %cst_46 {dimension_numbers = #tpu.dot_dimension_numbers<[1], [1], [0], [0], [0, 0, 1, 0], [], []>} : vector<16x128xbf16>, vector<32x128xbf16>, vector<16x32xf32> -> vector<16x32xf32>
    %190 = arith.addf %189, %133 : vector<16x32xf32>
    %191 = arith.addf %182, %190 : vector<16x32xf32>
    %cst_47 = arith.constant dense<0.000000e+00> : vector<16xf32>
    %192 = vector.multi_reduction <add>, %191, %cst_47 [1] : vector<16x32xf32> to vector<16xf32>
    %193 = vector.shape_cast %192 : vector<16xf32> to vector<16x1xf32>
    %cst_48 = arith.constant 3.200000e+01 : f32
    %194 = vector.broadcast %cst_48 : f32 to vector<16x1xf32>
    %195 = arith.divf %193, %194 : vector<16x1xf32>
    %196 = arith.mulf %191, %191 : vector<16x32xf32>
    %cst_49 = arith.constant dense<0.000000e+00> : vector<16xf32>
    %197 = vector.multi_reduction <add>, %196, %cst_49 [1] : vector<16x32xf32> to vector<16xf32>
    %198 = vector.shape_cast %197 : vector<16xf32> to vector<16x1xf32>
    %cst_50 = arith.constant 3.200000e+01 : f32
    %199 = vector.broadcast %cst_50 : f32 to vector<16x1xf32>
    %200 = arith.divf %198, %199 : vector<16x1xf32>
    %201 = vector.broadcast %195 : vector<16x1xf32> to vector<16x32xf32>
    %202 = arith.subf %191, %201 : vector<16x32xf32>
    %203 = arith.mulf %195, %195 : vector<16x1xf32>
    %204 = arith.subf %200, %203 : vector<16x1xf32>
    %cst_51 = arith.constant 9.99999974E-6 : f32
    %205 = vector.broadcast %cst_51 : f32 to vector<16x1xf32>
    %206 = arith.addf %204, %205 : vector<16x1xf32>
    %207 = math.rsqrt %206 : vector<16x1xf32>
    %208 = vector.broadcast %207 : vector<16x1xf32> to vector<16x32xf32>
    %209 = arith.mulf %202, %208 : vector<16x32xf32>
    %210 = arith.mulf %209, %136 : vector<16x32xf32>
    %211 = arith.addf %210, %137 : vector<16x32xf32>
    %cst_52 = arith.constant dense<0.000000e+00> : vector<16xf32>
    %212 = vector.multi_reduction <add>, %211, %cst_52 [1] : vector<16x32xf32> to vector<16xf32>
    %213 = vector.shape_cast %212 : vector<16xf32> to vector<16x1xf32>
    %cst_53 = arith.constant 3.200000e+01 : f32
    %214 = vector.broadcast %cst_53 : f32 to vector<16x1xf32>
    %215 = arith.divf %213, %214 : vector<16x1xf32>
    %216 = arith.mulf %211, %211 : vector<16x32xf32>
    %cst_54 = arith.constant dense<0.000000e+00> : vector<16xf32>
    %217 = vector.multi_reduction <add>, %216, %cst_54 [1] : vector<16x32xf32> to vector<16xf32>
    %218 = vector.shape_cast %217 : vector<16xf32> to vector<16x1xf32>
    %cst_55 = arith.constant 3.200000e+01 : f32
    %219 = vector.broadcast %cst_55 : f32 to vector<16x1xf32>
    %220 = arith.divf %218, %219 : vector<16x1xf32>
    %221 = vector.broadcast %215 : vector<16x1xf32> to vector<16x32xf32>
    %222 = arith.subf %211, %221 : vector<16x32xf32>
    %223 = arith.mulf %215, %215 : vector<16x1xf32>
    %224 = arith.subf %220, %223 : vector<16x1xf32>
    %cst_56 = arith.constant 9.99999974E-6 : f32
    %225 = vector.broadcast %cst_56 : f32 to vector<16x1xf32>
    %226 = arith.addf %224, %225 : vector<16x1xf32>
    %227 = math.rsqrt %226 : vector<16x1xf32>
    %228 = vector.broadcast %227 : vector<16x1xf32> to vector<16x32xf32>
    %229 = arith.mulf %222, %228 : vector<16x32xf32>
    %230 = arith.mulf %229, %5 : vector<16x32xf32>
    %231 = arith.addf %230, %6 : vector<16x32xf32>
    %c0_57 = arith.constant 0 : index
    %c0_58 = arith.constant 0 : index
    %232 = vector.load %arg4[%c0_57, %c0_58] : memref<16x32xf32, #tpu.memory_space<vmem>>, vector<16x32xf32>
    tpu.vector_store %arg4[%c0_57, %c0_58], %231 {strides = array<i32>} : memref<16x32xf32, #tpu.memory_space<vmem>>, vector<16x32xf32>,
    return
  }
}

</mosaic_0001>

<llo_original>
// kernel: wavelet_forward.1
$region0: #{wavelet_forward.1}
  #allocation0 [shape = 'u32[]', space=smem, size = 0x4, offset = 0x4, fixed_abs, tag = 'smem constant byte address 0x4 - core index']
  #allocation1 [shape = 'u32[144,128]{1,0:T(1,128)}', space=vmem, size = 0x12000, scoped, tag = 'internal scratch']
  %s0 = inlined_call_operand.vmem [shape: f32[32,4], index: 0, kind: input, shape index: {}]
  %s1 = inlined_call_operand.vmem [shape: f32[16,192], index: 1, kind: input, shape index: {}]
  %s2 = inlined_call_operand.hbm [shape: bf16[2,128,128], index: 2, kind: input, shape index: {}]
  %s3 = inlined_call_operand.hbm [shape: f32[2,16,512], index: 3, kind: input, shape index: {}]
  %s4 = inlined_call_operand.hbm [shape: f32[16,32], index: 4, kind: output, shape index: {}]
  %s5 = sld [smem:[#allocation0]]
  $region34: #{wavelet_forward.1} parent=0
    _
  %s7 = ssub.s32 1, %s5
  %s8 = scalar_select 0, %s7, %s5
  $region1: #{wavelet_forward.1} parent=0
    #allocation2 [shape = 'u8[65536]{0}', space=vmem, size = 0x10000, scoped, tag = 'input window, operand 2, single buffered']
    #allocation3 [shape = 's32[1]{0}', space=sflag, size = 0x4, scoped, tag = 'scoped memory for wavelet_forward.1']
    #allocation4 [shape = 's32[1]{0}', space=sflag, size = 0x4, scoped, tag = 'scoped memory for wavelet_forward.1']
    #allocation5 [shape = 'u8[65536]{0}', space=vmem, size = 0x10000, scoped, tag = 'input window, operand 3, single buffered']
    #allocation6 [shape = 's32[1]{0}', space=sflag, size = 0x4, scoped, tag = 'scoped memory for wavelet_forward.1']
    #allocation7 [shape = 'u8[8192]{0}', space=vmem, size = 0x2000, scoped, tag = 'output window, operand 0, single buffered']
    %9 = vsyncpa [#allocation3], 0
    %10 = vsyncpa [#allocation6], 0
    %11 = vsyncpa [#allocation4], 0
    // Predicated region
    $region2: #{wavelet_forward.1} parent=1 // pred_check
      _
    $region3: #{wavelet_forward.1} parent=1 // pred_check_branch
      %13 = sbr.rel (0) target = $region5
    $region4: #{wavelet_forward.1} parent=1 // pred_region
      _
    $region5: #{wavelet_forward.1} parent=1 // pred_fallthru
      _
    // Predicated region
    $region6: #{wavelet_forward.1} parent=1 // pred_check
      _
    $region7: #{wavelet_forward.1} parent=1 // pred_check_branch
      %15 = sbr.rel (0) target = $region9
    $region8: #{wavelet_forward.1} parent=1 // pred_region
      _
    $region9: #{wavelet_forward.1} parent=1 // pred_fallthru
      _
    // Predicated region
    $region10: #{wavelet_forward.1} parent=1 // pred_check
      _
    $region11: #{wavelet_forward.1} parent=1 // pred_check_branch
      %17 = sbr.rel (0) target = $region13
    $region12: #{wavelet_forward.1} parent=1 // pred_region
      %s19 = ssub.s32 2048, 2048
      %20 = vsyncadd [#allocation3], %s19
      %s21 = sshll.u32 [#allocation2], 4
      %s22 = int_to_ptr.vmem [resolvable:$true] %s21
      %27 = dma.hbm_to_vmem [thread:$0]  %s2, 2048, %s22, [#allocation3], 64, 64, 4
    $region13: #{wavelet_forward.1} parent=1 // pred_fallthru
      _
    // Predicated region
    $region14: #{wavelet_forward.1} parent=1 // pred_check
      _
    $region15: #{wavelet_forward.1} parent=1 // pred_check_branch
      %29 = sbr.rel (0) target = $region17
    $region16: #{wavelet_forward.1} parent=1 // pred_region
      %s31 = ssub.s32 2048, 2048
      %32 = vsyncadd [#allocation6], %s31
      %s33 = sshll.u32 [#allocation5], 4
      %s34 = int_to_ptr.vmem [resolvable:$true] %s33
      %39 = dma.hbm_to_vmem [thread:$0]  %s3, 2048, %s34, [#allocation6], 512, 512, 32
    $region17: #{wavelet_forward.1} parent=1 // pred_fallthru
      _
    // Predicated region
    $region18: #{wavelet_forward.1} parent=1 // pred_check
      _
    $region19: #{wavelet_forward.1} parent=1 // pred_check_branch
      %41 = sbr.rel (0) target = $region21
    $region20: #{wavelet_forward.1} parent=1 // pred_region
      %42 = dma.done [#allocation3], 2048
    $region21: #{wavelet_forward.1} parent=1 // pred_fallthru
      _
    // Predicated region
    $region22: #{wavelet_forward.1} parent=1 // pred_check
      _
    $region23: #{wavelet_forward.1} parent=1 // pred_check_branch
      %44 = sbr.rel (0) target = $region25
    $region24: #{wavelet_forward.1} parent=1 // pred_region
      %45 = dma.done [#allocation6], 2048
    $region25: #{wavelet_forward.1} parent=1 // pred_fallthru
      _
    %v47 = vld [vmem:[%s0] sm:$0xff]
    %v48 = vld [vmem:[%s0 + $0x8] sm:$0xff]
    %v49 = vld [vmem:[%s0 + $0x10] sm:$0xff]
    %v50 = vld [vmem:[%s0 + $0x18] sm:$0xff]
    %v51 = vld [vmem:[%s1] sm:$0xff]
    %v52 = vld [vmem:[%s1 + $0x8] sm:$0xff]
    %v53 = vld [vmem:[%s1 + $0x10] sm:$0xff]
    %v54 = vld [vmem:[%s1 + $0x18] sm:$0xff]
    %56 = vset.pattern.permute.xlu0 0
    %57 = vperm.xlu0 %56, %v47
    %v58 = vpop.permute.xlu0 %57
    %61 = vset.pattern.permute.xlu0 0
    %62 = vperm.xlu0 %61, %v48
    %v63 = vpop.permute.xlu0 %62
    %66 = vset.pattern.permute.xlu0 0
    %67 = vperm.xlu0 %66, %v49
    %v68 = vpop.permute.xlu0 %67
    %71 = vset.pattern.permute.xlu0 0
    %72 = vperm.xlu0 %71, %v50
    %v73 = vpop.permute.xlu0 %72
    %v75 = vlaneseq
    %v76 = vshrl.u32 %v75, 7
    %v77 = vsub.s32 0, %v76
    %v78 = vrot.slane %v51, %v77
    %v79 = vmul.f32 %v58, %v78
    %v80 = vmul.f32 %v63, %v78
    %v81 = vmul.f32 %v68, %v78
    %v82 = vmul.f32 %v73, %v78
    %83 = vset.pattern.permute.xlu0 1
    %84 = vperm.xlu0 %83, %v47
    %v85 = vpop.permute.xlu0 %84
    %87 = vset.pattern.permute.xlu0 1
    %88 = vperm.xlu0 %87, %v48
    %v89 = vpop.permute.xlu0 %88
    %91 = vset.pattern.permute.xlu0 1
    %92 = vperm.xlu0 %91, %v49
    %v93 = vpop.permute.xlu0 %92
    %95 = vset.pattern.permute.xlu0 1
    %96 = vperm.xlu0 %95, %v50
    %v97 = vpop.permute.xlu0 %96
    %v99 = vlaneseq
    %v100 = vshrl.u32 %v99, 7
    %v101 = vsub.s32 1, %v100
    %v102 = vrot.slane %v51, %v101
    %v103 = vmul.f32 %v85, %v102
    %v104 = vmul.f32 %v89, %v102
    %v105 = vmul.f32 %v93, %v102
    %v106 = vmul.f32 %v97, %v102
    %v107 = vadd.f32 %v79, %v103
    %v108 = vadd.f32 %v80, %v104
    %v109 = vadd.f32 %v81, %v105
    %v110 = vadd.f32 %v82, %v106
    %111 = vset.pattern.permute.xlu0 2
    %112 = vperm.xlu0 %111, %v47
    %v113 = vpop.permute.xlu0 %112
    %115 = vset.pattern.permute.xlu0 2
    %116 = vperm.xlu0 %115, %v48
    %v117 = vpop.permute.xlu0 %116
    %119 = vset.pattern.permute.xlu0 2
    %120 = vperm.xlu0 %119, %v49
    %v121 = vpop.permute.xlu0 %120
    %123 = vset.pattern.permute.xlu0 2
    %124 = vperm.xlu0 %123, %v50
    %v125 = vpop.permute.xlu0 %124
    %v127 = vlaneseq
    %v128 = vshrl.u32 %v127, 7
    %v129 = vsub.s32 2, %v128
    %v130 = vrot.slane %v51, %v129
    %v131 = vmul.f32 %v113, %v130
    %v132 = vmul.f32 %v117, %v130
    %v133 = vmul.f32 %v121, %v130
    %v134 = vmul.f32 %v125, %v130
    %v135 = vadd.f32 %v107, %v131
    %v136 = vadd.f32 %v108, %v132
    %v137 = vadd.f32 %v109, %v133
    %v138 = vadd.f32 %v110, %v134
    %139 = vset.pattern.permute.xlu0 3
    %140 = vperm.xlu0 %139, %v47
    %v141 = vpop.permute.xlu0 %140
    %143 = vset.pattern.permute.xlu0 3
    %144 = vperm.xlu0 %143, %v48
    %v145 = vpop.permute.xlu0 %144
    %147 = vset.pattern.permute.xlu0 3
    %148 = vperm.xlu0 %147, %v49
    %v149 = vpop.permute.xlu0 %148
    %151 = vset.pattern.permute.xlu0 3
    %152 = vperm.xlu0 %151, %v50
    %v153 = vpop.permute.xlu0 %152
    %v155 = vlaneseq
    %v156 = vshrl.u32 %v155, 7
    %v157 = vsub.s32 3, %v156
    %v158 = vrot.slane %v51, %v157
    %v159 = vmul.f32 %v141, %v158
    %v160 = vmul.f32 %v145, %v158
    %v161 = vmul.f32 %v149, %v158
    %v162 = vmul.f32 %v153, %v158
    %v163 = vadd.f32 %v135, %v159
    %v164 = vadd.f32 %v136, %v160
    %v165 = vadd.f32 %v137, %v161
    %v166 = vadd.f32 %v138, %v162
    %171 = vrot.lane.b32.xlu0 %v163, 48
    %v172 = vpop.permute.xlu0 %171
    %173 = vrot.lane.b32.xlu0 %v164, 48
    %v174 = vpop.permute.xlu0 %173
    %175 = vrot.lane.b32.xlu0 %v165, 48
    %v176 = vpop.permute.xlu0 %175
    %177 = vrot.lane.b32.xlu0 %v166, 48
    %v178 = vpop.permute.xlu0 %177
    %185 = vrot.lane.b32.xlu0 %v51, 96
    %v186 = vpop.permute.xlu0 %185
    %187 = vrot.lane.b32.xlu0 %v53, 96
    %v188 = vpop.permute.xlu0 %187
    %vm191 = vcmask 261120
    %v192 = vsel %vm191, %v51, 0
    %v194 = vsel %vm191, %v53, 0
    %196 = vmatprep.subr.mxu0 0.0
    %197 = vmatpush1.msra.mxu0 0.0
    %198 = vmatprep.subr.mxu0 0.0
    %199 = vmatpush1.msra.mxu0 0.0
    %200 = vmatprep.subr.mxu0 0.0
    %201 = vmatpush1.msra.mxu0 0.0
    %202 = vmatprep.subr.mxu0 0.0
    %203 = vmatpush1.msra.mxu0 0.0
    %204 = vmatprep.subr.mxu0 0.0
    %205 = vmatpush1.msra.mxu0 0.0
    %206 = vmatprep.subr.mxu0 0.0
    %207 = vmatpush1.msra.mxu0 0.0
    %208 = vmatprep.subr.mxu0 0.0
    %209 = vmatpush1.msra.mxu0 0.0
    %210 = vmatprep.subr.mxu0 0.0
    %211 = vmatpush1.msra.mxu0 0.0
    %212 = vmatprep.subr.mxu0 0.0
    %213 = vmatpush1.msra.mxu0 0.0
    %214 = vmatprep.subr.mxu0 0.0
    %215 = vmatpush1.msra.mxu0 0.0
    %216 = vmatprep.subr.mxu0 0.0
    %217 = vmatpush1.msra.mxu0 0.0
    %218 = vmatprep.subr.mxu0 0.0
    %219 = vmatpush1.msra.mxu0 0.0
    %220 = vmatprep.subr.mxu0 0.0
    %221 = vmatpush1.msra.mxu0 %v178
    %222 = vmatprep.subr.mxu0 0.0
    %223 = vmatpush1.msra.mxu0 %v176
    %224 = vmatprep.subr.mxu0 0.0
    %225 = vmatpush1.msra.mxu0 %v174
    %226 = vmatprep.subr.mxu0 0.0
    %227 = vmatpush1.msra.mxu0 %v172
    %228 = vmatprep.subr.mxu0 0.0
    %229 = vmatpush2.msra.mxu0 0.0
    %230 = vmatprep.subr.mxu0 0.0
    %231 = vmatpush2.msra.mxu0 0.0
    %232 = vmatprep.subr.mxu0 0.0
    %233 = vmatpush2.msra.mxu0 0.0
    %234 = vmatprep.subr.mxu0 0.0
    %235 = vmatpush2.msra.mxu0 0.0
    %236 = vmatprep.subr.mxu0 0.0
    %237 = vmatpush2.msra.mxu0 0.0
    %238 = vmatprep.subr.mxu0 0.0
    %239 = vmatpush2.msra.mxu0 0.0
    %240 = vmatprep.subr.mxu0 0.0
    %241 = vmatpush2.msra.mxu0 0.0
    %242 = vmatprep.subr.mxu0 0.0
    %243 = vmatpush2.msra.mxu0 0.0
    %244 = vmatprep.subr.mxu0 0.0
    %245 = vmatpush2.msra.mxu0 0.0
    %246 = vmatprep.subr.mxu0 0.0
    %247 = vmatpush2.msra.mxu0 0.0
    %248 = vmatprep.subr.mxu0 0.0
    %249 = vmatpush2.msra.mxu0 0.0
    %250 = vmatprep.subr.mxu0 0.0
    %251 = vmatpush2.msra.mxu0 0.0
    %252 = vmatprep.subr.mxu0 0.0
    %253 = vmatpush2.msra.mxu0 0.0
    %254 = vmatprep.subr.mxu0 0.0
    %255 = vmatpush2.msra.mxu0 0.0
    %256 = vmatprep.subr.mxu0 0.0
    %257 = vmatpush2.msra.mxu0 0.0
    %258 = vmatprep.subr.mxu0 0.0
    %259 = vmatpush2.msra.mxu0 0.0
    %260 = vmatprep.mubr.f32.mxu0 0.0
    %261 = vmatmul.mubr.f32.gmra.mxu0 %v192
    %v262 = vpop.f32.mrf.mxu0
    %v263 = vadd.f32 %v186, %v262
    %v264 = vpop.f32.mrf.mxu0
    %265 = vmatprep.mubr.f32.mxu0 0.0
    %266 = vmatmul.mubr.f32.gmra.mxu0 %v194
    %v267 = vpop.f32.mrf.mxu0
    %v268 = vadd.f32 %v188, %v267
    %v269 = vpop.f32.mrf.mxu0
    %270 = vdwg.mxu0
    %v271 = vld [vmem:[#allocation2] sm:$0xf]
    %v272 = vld [vmem:[#allocation2 + $0x4] sm:$0xf]
    %v273 = vld [vmem:[#allocation2 + $0x8] sm:$0xf]
    %v274 = vld [vmem:[#allocation2 + $0xc] sm:$0xf]
    %v275 = vld [vmem:[#allocation2 + $0x10] sm:$0xf]
    %v276 = vld [vmem:[#allocation2 + $0x14] sm:$0xf]
    %v277 = vld [vmem:[#allocation2 + $0x18] sm:$0xf]
    %v278 = vld [vmem:[#allocation2 + $0x1c] sm:$0xf]
    %v279 = vld [vmem:[#allocation2 + $0x20] sm:$0xf]
    %v280 = vld [vmem:[#allocation2 + $0x24] sm:$0xf]
    %v281 = vld [vmem:[#allocation2 + $0x28] sm:$0xf]
    %v282 = vld [vmem:[#allocation2 + $0x2c] sm:$0xf]
    %v283 = vld [vmem:[#allocation2 + $0x30] sm:$0xf]
    %v284 = vld [vmem:[#allocation2 + $0x34] sm:$0xf]
    %v285 = vld [vmem:[#allocation2 + $0x38] sm:$0xf]
    %v286 = vld [vmem:[#allocation2 + $0x3c] sm:$0xf]
    %v287 = vld [vmem:[#allocation5] sm:$0xff]
    %v288 = vld [vmem:[#allocation5 + $0x8] sm:$0xff]
    %v289 = vld [vmem:[#allocation5 + $0x10] sm:$0xff]
    %v290 = vld [vmem:[#allocation5 + $0x18] sm:$0xff]
    %v291 = vld [vmem:[#allocation5 + $0x20] sm:$0xff]
    %v292 = vld [vmem:[#allocation5 + $0x28] sm:$0xff]
    %v293 = vld [vmem:[#allocation5 + $0x30] sm:$0xff]
    %v294 = vld [vmem:[#allocation5 + $0x38] sm:$0xff]
    %v295 = vpack.c.bf16 %v268, %v263
    %v300 = vunpack.c.l.b16 %v271
    %v301 = vunpack.c.l.b16 %v272
    %v302 = vunpack.c.l.b16 %v273
    %v303 = vunpack.c.l.b16 %v274
    %v304 = vpack.c.b16 %v301, %v300
    %v305 = vpack.c.b16 %v303, %v302
    %v309 = vsel %vm191, %v295, 0
    %311 = vmatprep.subr.bf16.mxu0 0
    %312 = vmatpush1.bf16.msra.mxu0 0
    %313 = vmatprep.subr.bf16.mxu0 0
    %314 = vmatpush1.bf16.msra.mxu0 0
    %315 = vmatprep.subr.bf16.mxu0 0
    %316 = vmatpush1.bf16.msra.mxu0 0
    %317 = vmatprep.subr.bf16.mxu0 0
    %318 = vmatpush1.bf16.msra.mxu0 0
    %319 = vmatprep.subr.bf16.mxu0 0
    %320 = vmatpush1.bf16.msra.mxu0 0
    %321 = vmatprep.subr.bf16.mxu0 0
    %322 = vmatpush1.bf16.msra.mxu0 0
    %323 = vmatprep.subr.bf16.mxu0 0
    %324 = vmatpush1.bf16.msra.mxu0 %v305
    %325 = vmatprep.subr.bf16.mxu0 0
    %326 = vmatpush1.bf16.msra.mxu0 %v304
    %327 = vmatprep.subr.bf16.mxu0 0
    %328 = vmatpush2.bf16.msra.mxu0 0
    %329 = vmatprep.subr.bf16.mxu0 0
    %330 = vmatpush2.bf16.msra.mxu0 0
    %331 = vmatprep.subr.bf16.mxu0 0
    %332 = vmatpush2.bf16.msra.mxu0 0
    %333 = vmatprep.subr.bf16.mxu0 0
    %334 = vmatpush2.bf16.msra.mxu0 0
    %335 = vmatprep.subr.bf16.mxu0 0
    %336 = vmatpush2.bf16.msra.mxu0 0
    %337 = vmatprep.subr.bf16.mxu0 0
    %338 = vmatpush2.bf16.msra.mxu0 0
    %339 = vmatprep.subr.bf16.mxu0 0
    %340 = vmatpush2.bf16.msra.mxu0 0
    %341 = vmatprep.subr.bf16.mxu0 0
    %342 = vmatpush2.bf16.msra.mxu0 0
    %343 = vmatprep.mubr.bf16.mxu0 0
    %344 = vmatmul.mubr.bf16.gmra.mxu0 %v309
    %v345 = vpop.f32.mrf.mxu0
    %v346 = vadd.f32 %v287, %v345
    %v347 = vpop.f32.mrf.mxu0
    %v348 = vpop.f32.mrf.mxu0
    %v349 = vadd.f32 %v291, %v348
    %v350 = vpop.f32.mrf.mxu0
    %351 = vdwg.mxu0
    %v352 = vpack.c.bf16 %v349, %v346
    %354 = vrot.lane.b32.xlu0 %v352, 96
    %v355 = vpop.permute.xlu0 %354
    %v357 = vsel %vm191, %v352, 0
    %v360 = vsel %vm191, %v355, 0
    %362 = vmatprep.subr.bf16.mxu0 0
    %363 = vmatpush1.bf16.xpose.msra.mxu0 0
    %364 = vmatprep.subr.bf16.mxu0 0
    %365 = vmatpush1.bf16.xpose.msra.mxu0 0
    %366 = vmatprep.subr.bf16.mxu0 0
    %367 = vmatpush1.bf16.xpose.msra.mxu0 0
    %368 = vmatprep.subr.bf16.mxu0 0
    %369 = vmatpush1.bf16.xpose.msra.mxu0 0
    %370 = vmatprep.subr.bf16.mxu0 0
    %371 = vmatpush1.bf16.xpose.msra.mxu0 0
    %372 = vmatprep.subr.bf16.mxu0 0
    %373 = vmatpush1.bf16.xpose.msra.mxu0 0
    %374 = vmatprep.subr.bf16.mxu0 0
    %375 = vmatpush1.bf16.xpose.msra.mxu0 0
    %376 = vmatprep.subr.bf16.mxu0 0
    %377 = vmatpush1.bf16.xpose.msra.mxu0 %v360
    %378 = vmatprep.subr.bf16.mxu0 0
    %379 = vmatpush2.bf16.xpose.msra.mxu0 0
    %380 = vmatprep.subr.bf16.mxu0 0
    %381 = vmatpush2.bf16.xpose.msra.mxu0 0
    %382 = vmatprep.subr.bf16.mxu0 0
    %383 = vmatpush2.bf16.xpose.msra.mxu0 0
    %384 = vmatprep.subr.bf16.mxu0 0
    %385 = vmatpush2.bf16.xpose.msra.mxu0 0
    %386 = vmatprep.subr.bf16.mxu0 0
    %387 = vmatpush2.bf16.xpose.msra.mxu0 0
    %388 = vmatprep.subr.bf16.mxu0 0
    %389 = vmatpush2.bf16.xpose.msra.mxu0 0
    %390 = vmatprep.subr.bf16.mxu0 0
    %391 = vmatpush2.bf16.xpose.msra.mxu0 0
    %392 = vmatprep.subr.bf16.mxu0 0
    %393 = vmatpush2.bf16.xpose.msra.mxu0 0
    %394 = vmatprep.mubr.bf16.mxu0 0
    %395 = vmatmul.mubr.bf16.gmra.mxu0 %v357
    %v396 = vpop.f32.mrf.mxu0
    %v397 = vadd.f32 0.0, %v396
    %v398 = vpop.f32.mrf.mxu0
    %v399 = vpop.f32.mrf.mxu0
    %v400 = vadd.f32 0.0, %v399
    %v401 = vpop.f32.mrf.mxu0
    %402 = vdwg.mxu0
    %v403 = vmul.f32 %v397, 0.17677669
    %v404 = vmul.f32 %v400, 0.17677669
    %405 = vrot.lane.b32.xlu0 %v51, 64
    %v406 = vpop.permute.xlu0 %405
    %407 = vrot.lane.b32.xlu0 %v53, 64
    %v408 = vpop.permute.xlu0 %407
    %v411 = vadd.f32 %v403, %v406
    %v412 = vadd.f32 %v404, %v408
    %v413 = vmul.f32 %v411, 1.442695
    %v414 = vpow.pop %v413
    %v415 = vmul.f32 %v412, 1.442695
    %v416 = vpow.pop %v415
    %vm417 = vcmask 130048
    %v418 = vsel %vm417, %v414, 0.0
    %419 = vadd.xlane.f32.xlu0 %v418
    %v420 = vpop.xlane.xlu0 %419
    %v421 = vsel %vm417, %v416, 0.0
    %422 = vadd.xlane.f32.xlu0 %v421
    %v423 = vpop.xlane.xlu0 %422
    %v424 = vrcp.pop %v420
    %v425 = vrcp.pop %v423
    %v426 = vmul.f32 %v414, %v424
    %v427 = vmul.f32 %v416, %v425
    %v428 = vpack.c.bf16 %v427, %v426
    %429 = vrot.lane.b32.xlu0 %v352, 64
    %v430 = vpop.permute.xlu0 %429
    %v433 = vsel %vm417, %v428, 0
    %435 = vmatprep.subr.bf16.mxu0 0
    %436 = vmatpush1.bf16.msra.mxu0 0
    %437 = vmatprep.subr.bf16.mxu0 0
    %438 = vmatpush1.bf16.msra.mxu0 0
    %439 = vmatprep.subr.bf16.mxu0 0
    %440 = vmatpush1.bf16.msra.mxu0 0
    %441 = vmatprep.subr.bf16.mxu0 0
    %442 = vmatpush1.bf16.msra.mxu0 0
    %443 = vmatprep.subr.bf16.mxu0 0
    %444 = vmatpush1.bf16.msra.mxu0 0
    %445 = vmatprep.subr.bf16.mxu0 0
    %446 = vmatpush1.bf16.msra.mxu0 0
    %447 = vmatprep.subr.bf16.mxu0 0
    %448 = vmatpush1.bf16.msra.mxu0 0
    %449 = vmatprep.subr.bf16.mxu0 0
    %450 = vmatpush1.bf16.msra.mxu0 %v430
    %451 = vmatprep.subr.bf16.mxu0 0
    %452 = vmatpush2.bf16.msra.mxu0 0
    %453 = vmatprep.subr.bf16.mxu0 0
    %454 = vmatpush2.bf16.msra.mxu0 0
    %455 = vmatprep.subr.bf16.mxu0 0
    %456 = vmatpush2.bf16.msra.mxu0 0
    %457 = vmatprep.subr.bf16.mxu0 0
    %458 = vmatpush2.bf16.msra.mxu0 0
    %459 = vmatprep.subr.bf16.mxu0 0
    %460 = vmatpush2.bf16.msra.mxu0 0
    %461 = vmatprep.subr.bf16.mxu0 0
    %462 = vmatpush2.bf16.msra.mxu0 0
    %463 = vmatprep.subr.bf16.mxu0 0
    %464 = vmatpush2.bf16.msra.mxu0 0
    %465 = vmatprep.subr.bf16.mxu0 0
    %466 = vmatpush2.bf16.msra.mxu0 0
    %467 = vmatprep.mubr.bf16.mxu0 0
    %468 = vmatmul.mubr.bf16.gmra.mxu0 %v433
    %v469 = vpop.f32.mrf.mxu0
    %v470 = vadd.f32 0.0, %v469
    %v471 = vpop.f32.mrf.mxu0
    %v472 = vpop.f32.mrf.mxu0
    %v473 = vadd.f32 0.0, %v472
    %v474 = vpop.f32.mrf.mxu0
    %475 = vdwg.mxu0
    %v476 = vpack.c.bf16 %v473, %v470
    %v481 = vunpack.c.l.b16 %v275
    %v482 = vunpack.c.l.b16 %v276
    %v483 = vunpack.c.l.b16 %v277
    %v484 = vunpack.c.l.b16 %v278
    %v485 = vpack.c.b16 %v482, %v481
    %v486 = vpack.c.b16 %v484, %v483
    %v490 = vsel %vm191, %v476, 0
    %492 = vmatprep.subr.bf16.mxu0 0
    %493 = vmatpush1.bf16.msra.mxu0 0
    %494 = vmatprep.subr.bf16.mxu0 0
    %495 = vmatpush1.bf16.msra.mxu0 0
    %496 = vmatprep.subr.bf16.mxu0 0
    %497 = vmatpush1.bf16.msra.mxu0 0
    %498 = vmatprep.subr.bf16.mxu0 0
    %499 = vmatpush1.bf16.msra.mxu0 0
    %500 = vmatprep.subr.bf16.mxu0 0
    %501 = vmatpush1.bf16.msra.mxu0 0
    %502 = vmatprep.subr.bf16.mxu0 0
    %503 = vmatpush1.bf16.msra.mxu0 0
    %504 = vmatprep.subr.bf16.mxu0 0
    %505 = vmatpush1.bf16.msra.mxu0 %v486
    %506 = vmatprep.subr.bf16.mxu0 0
    %507 = vmatpush1.bf16.msra.mxu0 %v485
    %508 = vmatprep.subr.bf16.mxu0 0
    %509 = vmatpush2.bf16.msra.mxu0 0
    %510 = vmatprep.subr.bf16.mxu0 0
    %511 = vmatpush2.bf16.msra.mxu0 0
    %512 = vmatprep.subr.bf16.mxu0 0
    %513 = vmatpush2.bf16.msra.mxu0 0
    %514 = vmatprep.subr.bf16.mxu0 0
    %515 = vmatpush2.bf16.msra.mxu0 0
    %516 = vmatprep.subr.bf16.mxu0 0
    %517 = vmatpush2.bf16.msra.mxu0 0
    %518 = vmatprep.subr.bf16.mxu0 0
    %519 = vmatpush2.bf16.msra.mxu0 0
    %520 = vmatprep.subr.bf16.mxu0 0
    %521 = vmatpush2.bf16.msra.mxu0 0
    %522 = vmatprep.subr.bf16.mxu0 0
    %523 = vmatpush2.bf16.msra.mxu0 0
    %524 = vmatprep.mubr.bf16.mxu0 0
    %525 = vmatmul.mubr.bf16.gmra.mxu0 %v490
    %v526 = vpop.f32.mrf.mxu0
    %v527 = vadd.f32 %v289, %v526
    %v528 = vpop.f32.mrf.mxu0
    %v529 = vpop.f32.mrf.mxu0
    %v530 = vadd.f32 %v293, %v529
    %v531 = vpop.f32.mrf.mxu0
    %532 = vdwg.mxu0
    %v533 = vadd.f32 %v263, %v527
    %v534 = vadd.f32 %v268, %v530
    %v535 = vsel %vm191, %v533, 0.0
    %536 = vadd.xlane.f32.xlu0 %v535
    %v537 = vpop.xlane.xlu0 %536
    %v538 = vsel %vm191, %v534, 0.0
    %539 = vadd.xlane.f32.xlu0 %v538
    %v540 = vpop.xlane.xlu0 %539
    %v541 = vrcp.pop 32.0
    %v542 = vmul.f32 %v537, %v541
    %v543 = vmul.f32 %v540, %v541
    %v544 = vmul.f32 %v533, %v533
    %v545 = vmul.f32 %v534, %v534
    %v546 = vsel %vm191, %v544, 0.0
    %547 = vadd.xlane.f32.xlu0 %v546
    %v548 = vpop.xlane.xlu0 %547
    %v549 = vsel %vm191, %v545, 0.0
    %550 = vadd.xlane.f32.xlu0 %v549
    %v551 = vpop.xlane.xlu0 %550
    %v552 = vmul.f32 %v548, %v541
    %v553 = vmul.f32 %v551, %v541
    %v554 = vsub.f32 %v533, %v542
    %v555 = vsub.f32 %v534, %v543
    %v556 = vmul.f32 %v542, %v542
    %v557 = vmul.f32 %v543, %v543
    %v558 = vsub.f32 %v552, %v556
    %v559 = vsub.f32 %v553, %v557
    %v560 = vadd.f32 %v558, 1e-05
    %v561 = vadd.f32 %v559, 1e-05
    %v562 = vrsqrt.pop %v560
    %v563 = vrsqrt.pop %v561
    %v564 = vmul.f32 %v554, %v562
    %v565 = vmul.f32 %v555, %v563
    %568 = vrot.lane.b32.xlu0 %v289, 64
    %v569 = vpop.permute.xlu0 %568
    %570 = vrot.lane.b32.xlu0 %v293, 64
    %v571 = vpop.permute.xlu0 %570
    %v574 = vmul.f32 %v564, %v569
    %v575 = vmul.f32 %v565, %v571
    %576 = vrot.lane.b32.xlu0 %v289, 32
    %v577 = vpop.permute.xlu0 %576
    %578 = vrot.lane.b32.xlu0 %v293, 32
    %v579 = vpop.permute.xlu0 %578
    %v582 = vadd.f32 %v574, %v577
    %v583 = vadd.f32 %v575, %v579
    %v584 = vpack.c.bf16 %v583, %v582
    %v589 = vunpack.c.l.b16 %v279
    %v590 = vunpack.c.l.b16 %v280
    %v591 = vunpack.c.l.b16 %v281
    %v592 = vunpack.c.l.b16 %v282
    %v593 = vpack.c.b16 %v590, %v589
    %v594 = vpack.c.b16 %v592, %v591
    %v598 = vsel %vm191, %v584, 0
    %600 = vmatprep.subr.bf16.mxu0 0
    %601 = vmatpush1.bf16.msra.mxu0 0
    %602 = vmatprep.subr.bf16.mxu0 0
    %603 = vmatpush1.bf16.msra.mxu0 0
    %604 = vmatprep.subr.bf16.mxu0 0
    %605 = vmatpush1.bf16.msra.mxu0 0
    %606 = vmatprep.subr.bf16.mxu0 0
    %607 = vmatpush1.bf16.msra.mxu0 0
    %608 = vmatprep.subr.bf16.mxu0 0
    %609 = vmatpush1.bf16.msra.mxu0 0
    %610 = vmatprep.subr.bf16.mxu0 0
    %611 = vmatpush1.bf16.msra.mxu0 0
    %612 = vmatprep.subr.bf16.mxu0 0
    %613 = vmatpush1.bf16.msra.mxu0 %v594
    %614 = vmatprep.subr.bf16.mxu0 0
    %615 = vmatpush1.bf16.msra.mxu0 %v593
    %616 = vmatprep.subr.bf16.mxu0 0
    %617 = vmatpush2.bf16.msra.mxu0 0
    %618 = vmatprep.subr.bf16.mxu0 0
    %619 = vmatpush2.bf16.msra.mxu0 0
    %620 = vmatprep.subr.bf16.mxu0 0
    %621 = vmatpush2.bf16.msra.mxu0 0
    %622 = vmatprep.subr.bf16.mxu0 0
    %623 = vmatpush2.bf16.msra.mxu0 0
    %624 = vmatprep.subr.bf16.mxu0 0
    %625 = vmatpush2.bf16.msra.mxu0 0
    %626 = vmatprep.subr.bf16.mxu0 0
    %627 = vmatpush2.bf16.msra.mxu0 0
    %628 = vmatprep.subr.bf16.mxu0 0
    %629 = vmatpush2.bf16.msra.mxu0 0
    %630 = vmatprep.subr.bf16.mxu0 0
    %631 = vmatpush2.bf16.msra.mxu0 0
    %632 = vmatprep.mubr.bf16.mxu0 0
    %633 = vmatmul.mubr.bf16.gmra.mxu0 %v598
    %v634 = vpop.f32.mrf.mxu0
    %v635 = vadd.f32 %v288, %v634
    %v636 = vpop.f32.mrf.mxu0
    %v637 = vpop.f32.mrf.mxu0
    %v638 = vadd.f32 %v292, %v637
    %v639 = vpop.f32.mrf.mxu0
    %640 = vdwg.mxu0
    %v641 = vmax.f32 %v635, 0.0
    %v642 = vmax.f32 %v638, 0.0
    %v643 = vpack.c.bf16 %v642, %v641
    %v648 = vunpack.c.l.b16 %v283
    %v649 = vunpack.c.l.b16 %v284
    %v650 = vunpack.c.l.b16 %v285
    %v651 = vunpack.c.l.b16 %v286
    %v652 = vpack.c.b16 %v649, %v648
    %v653 = vpack.c.b16 %v651, %v650
    %656 = vrot.lane.b32.xlu0 %v289, 96
    %v657 = vpop.permute.xlu0 %656
    %658 = vrot.lane.b32.xlu0 %v293, 96
    %v659 = vpop.permute.xlu0 %658
    %662 = vmatprep.subr.bf16.mxu0 0
    %663 = vmatpush1.bf16.xpose.msra.mxu0 0
    %664 = vmatprep.subr.bf16.mxu0 0
    %665 = vmatpush1.bf16.xpose.msra.mxu0 0
    %666 = vmatprep.subr.bf16.mxu0 0
    %667 = vmatpush1.bf16.xpose.msra.mxu0 0
    %668 = vmatprep.subr.bf16.mxu0 0
    %669 = vmatpush1.bf16.xpose.msra.mxu0 0
    %670 = vmatprep.subr.bf16.mxu0 0
    %671 = vmatpush1.bf16.xpose.msra.mxu0 0
    %672 = vmatprep.subr.bf16.mxu0 0
    %673 = vmatpush1.bf16.xpose.msra.mxu0 0
    %674 = vmatprep.subr.bf16.mxu0 0
    %675 = vmatpush1.bf16.xpose.msra.mxu0 %v653
    %676 = vmatprep.subr.bf16.mxu0 0
    %677 = vmatpush1.bf16.xpose.msra.mxu0 %v652
    %678 = vmatprep.subr.bf16.mxu0 0
    %679 = vmatpush2.bf16.xpose.msra.mxu0 0
    %680 = vmatprep.subr.bf16.mxu0 0
    %681 = vmatpush2.bf16.xpose.msra.mxu0 0
    %682 = vmatprep.subr.bf16.mxu0 0
    %683 = vmatpush2.bf16.xpose.msra.mxu0 0
    %684 = vmatprep.subr.bf16.mxu0 0
    %685 = vmatpush2.bf16.xpose.msra.mxu0 0
    %686 = vmatprep.subr.bf16.mxu0 0
    %687 = vmatpush2.bf16.xpose.msra.mxu0 0
    %688 = vmatprep.subr.bf16.mxu0 0
    %689 = vmatpush2.bf16.xpose.msra.mxu0 0
    %690 = vmatprep.subr.bf16.mxu0 0
    %691 = vmatpush2.bf16.xpose.msra.mxu0 0
    %692 = vmatprep.subr.bf16.mxu0 0
    %693 = vmatpush2.bf16.xpose.msra.mxu0 0
    %694 = vmatprep.mubr.bf16.mxu0 0
    %695 = vmatmul.mubr.bf16.gmra.mxu0 %v643
    %v696 = vpop.f32.mrf.mxu0
    %v697 = vadd.f32 %v657, %v696
    %v698 = vpop.f32.mrf.mxu0
    %v699 = vpop.f32.mrf.mxu0
    %v700 = vadd.f32 %v659, %v699
    %v701 = vpop.f32.mrf.mxu0
    %702 = vdwg.mxu0
    %v703 = vadd.f32 %v582, %v697
    %v704 = vadd.f32 %v583, %v700
    %v705 = vsel %vm191, %v703, 0.0
    %706 = vadd.xlane.f32.xlu0 %v705
    %v707 = vpop.xlane.xlu0 %706
    %v708 = vsel %vm191, %v704, 0.0
    %709 = vadd.xlane.f32.xlu0 %v708
    %v710 = vpop.xlane.xlu0 %709
    %v711 = vmul.f32 %v707, %v541
    %v712 = vmul.f32 %v710, %v541
    %v713 = vmul.f32 %v703, %v703
    %v714 = vmul.f32 %v704, %v704
    %v715 = vsel %vm191, %v713, 0.0
    %716 = vadd.xlane.f32.xlu0 %v715
    %v717 = vpop.xlane.xlu0 %716
    %v718 = vsel %vm191, %v714, 0.0
    %719 = vadd.xlane.f32.xlu0 %v718
    %v720 = vpop.xlane.xlu0 %719
    %v721 = vmul.f32 %v717, %v541
    %v722 = vmul.f32 %v720, %v541
    %v723 = vsub.f32 %v703, %v711
    %v724 = vsub.f32 %v704, %v712
    %v725 = vmul.f32 %v711, %v711
    %v726 = vmul.f32 %v712, %v712
    %v727 = vsub.f32 %v721, %v725
    %v728 = vsub.f32 %v722, %v726
    %v729 = vadd.f32 %v727, 1e-05
    %v730 = vadd.f32 %v728, 1e-05
    %v731 = vrsqrt.pop %v729
    %v732 = vrsqrt.pop %v730
    %v733 = vmul.f32 %v723, %v731
    %v734 = vmul.f32 %v724, %v732
    %v735 = vmul.f32 %v733, %v290
    %v736 = vmul.f32 %v734, %v294
    %739 = vrot.lane.b32.xlu0 %v290, 96
    %v740 = vpop.permute.xlu0 %739
    %741 = vrot.lane.b32.xlu0 %v294, 96
    %v742 = vpop.permute.xlu0 %741
    %v745 = vadd.f32 %v735, %v740
    %v746 = vadd.f32 %v736, %v742
    %s747 = scalar_lea.vmem [#allocation2], 64
    %v748 = vld [vmem:[%s747] sm:$0xf]
    %v749 = vld [vmem:[%s747 + $0x4] sm:$0xf]
    %v750 = vld [vmem:[%s747 + $0x8] sm:$0xf]
    %v751 = vld [vmem:[%s747 + $0xc] sm:$0xf]
    %v752 = vld [vmem:[%s747 + $0x10] sm:$0xf]
    %v753 = vld [vmem:[%s747 + $0x14] sm:$0xf]
    %v754 = vld [vmem:[%s747 + $0x18] sm:$0xf]
    %v755 = vld [vmem:[%s747 + $0x1c] sm:$0xf]
    %v756 = vld [vmem:[%s747 + $0x20] sm:$0xf]
    %v757 = vld [vmem:[%s747 + $0x24] sm:$0xf]
    %v758 = vld [vmem:[%s747 + $0x28] sm:$0xf]
    %v759 = vld [vmem:[%s747 + $0x2c] sm:$0xf]
    %v760 = vld [vmem:[%s747 + $0x30] sm:$0xf]
    %v761 = vld [vmem:[%s747 + $0x34] sm:$0xf]
    %v762 = vld [vmem:[%s747 + $0x38] sm:$0xf]
    %v763 = vld [vmem:[%s747 + $0x3c] sm:$0xf]
    %s764 = scalar_lea.vmem [#allocation5], 64
    %v765 = vld [vmem:[%s764] sm:$0xff]
    %v766 = vld [vmem:[%s764 + $0x8] sm:$0xff]
    %v767 = vld [vmem:[%s764 + $0x10] sm:$0xff]
    %v768 = vld [vmem:[%s764 + $0x18] sm:$0xff]
    %v769 = vld [vmem:[%s764 + $0x20] sm:$0xff]
    %v770 = vld [vmem:[%s764 + $0x28] sm:$0xff]
    %v771 = vld [vmem:[%s764 + $0x30] sm:$0xff]
    %v772 = vld [vmem:[%s764 + $0x38] sm:$0xff]
    %v773 = vpack.c.bf16 %v746, %v745
    %v778 = vunpack.c.l.b16 %v748
    %v779 = vunpack.c.l.b16 %v749
    %v780 = vunpack.c.l.b16 %v750
    %v781 = vunpack.c.l.b16 %v751
    %v782 = vpack.c.b16 %v779, %v778
    %v783 = vpack.c.b16 %v781, %v780
    %v787 = vsel %vm191, %v773, 0
    %789 = vmatprep.subr.bf16.mxu0 0
    %790 = vmatpush1.bf16.msra.mxu0 0
    %791 = vmatprep.subr.bf16.mxu0 0
    %792 = vmatpush1.bf16.msra.mxu0 0
    %793 = vmatprep.subr.bf16.mxu0 0
    %794 = vmatpush1.bf16.msra.mxu0 0
    %795 = vmatprep.subr.bf16.mxu0 0
    %796 = vmatpush1.bf16.msra.mxu0 0
    %797 = vmatprep.subr.bf16.mxu0 0
    %798 = vmatpush1.bf16.msra.mxu0 0
    %799 = vmatprep.subr.bf16.mxu0 0
    %800 = vmatpush1.bf16.msra.mxu0 0
    %801 = vmatprep.subr.bf16.mxu0 0
    %802 = vmatpush1.bf16.msra.mxu0 %v783
    %803 = vmatprep.subr.bf16.mxu0 0
    %804 = vmatpush1.bf16.msra.mxu0 %v782
    %805 = vmatprep.subr.bf16.mxu0 0
    %806 = vmatpush2.bf16.msra.mxu0 0
    %807 = vmatprep.subr.bf16.mxu0 0
    %808 = vmatpush2.bf16.msra.mxu0 0
    %809 = vmatprep.subr.bf16.mxu0 0
    %810 = vmatpush2.bf16.msra.mxu0 0
    %811 = vmatprep.subr.bf16.mxu0 0
    %812 = vmatpush2.bf16.msra.mxu0 0
    %813 = vmatprep.subr.bf16.mxu0 0
    %814 = vmatpush2.bf16.msra.mxu0 0
    %815 = vmatprep.subr.bf16.mxu0 0
    %816 = vmatpush2.bf16.msra.mxu0 0
    %817 = vmatprep.subr.bf16.mxu0 0
    %818 = vmatpush2.bf16.msra.mxu0 0
    %819 = vmatprep.subr.bf16.mxu0 0
    %820 = vmatpush2.bf16.msra.mxu0 0
    %821 = vmatprep.mubr.bf16.mxu0 0
    %822 = vmatmul.mubr.bf16.gmra.mxu0 %v787
    %v823 = vpop.f32.mrf.mxu0
    %v824 = vadd.f32 %v765, %v823
    %v825 = vpop.f32.mrf.mxu0
    %v826 = vpop.f32.mrf.mxu0
    %v827 = vadd.f32 %v769, %v826
    %v828 = vpop.f32.mrf.mxu0
    %829 = vdwg.mxu0
    %v830 = vpack.c.bf16 %v827, %v824
    %832 = vrot.lane.b32.xlu0 %v830, 96
    %v833 = vpop.permute.xlu0 %832
    %v835 = vsel %vm191, %v830, 0
    %v838 = vsel %vm191, %v833, 0
    %840 = vmatprep.subr.bf16.mxu0 0
    %841 = vmatpush1.bf16.xpose.msra.mxu0 0
    %842 = vmatprep.subr.bf16.mxu0 0
    %843 = vmatpush1.bf16.xpose.msra.mxu0 0
    %844 = vmatprep.subr.bf16.mxu0 0
    %845 = vmatpush1.bf16.xpose.msra.mxu0 0
    %846 = vmatprep.subr.bf16.mxu0 0
    %847 = vmatpush1.bf16.xpose.msra.mxu0 0
    %848 = vmatprep.subr.bf16.mxu0 0
    %849 = vmatpush1.bf16.xpose.msra.mxu0 0
    %850 = vmatprep.subr.bf16.mxu0 0
    %851 = vmatpush1.bf16.xpose.msra.mxu0 0
    %852 = vmatprep.subr.bf16.mxu0 0
    %853 = vmatpush1.bf16.xpose.msra.mxu0 0
    %854 = vmatprep.subr.bf16.mxu0 0
    %855 = vmatpush1.bf16.xpose.msra.mxu0 %v838
    %856 = vmatprep.subr.bf16.mxu0 0
    %857 = vmatpush2.bf16.xpose.msra.mxu0 0
    %858 = vmatprep.subr.bf16.mxu0 0
    %859 = vmatpush2.bf16.xpose.msra.mxu0 0
    %860 = vmatprep.subr.bf16.mxu0 0
    %861 = vmatpush2.bf16.xpose.msra.mxu0 0
    %862 = vmatprep.subr.bf16.mxu0 0
    %863 = vmatpush2.bf16.xpose.msra.mxu0 0
    %864 = vmatprep.subr.bf16.mxu0 0
    %865 = vmatpush2.bf16.xpose.msra.mxu0 0
    %866 = vmatprep.subr.bf16.mxu0 0
    %867 = vmatpush2.bf16.xpose.msra.mxu0 0
    %868 = vmatprep.subr.bf16.mxu0 0
    %869 = vmatpush2.bf16.xpose.msra.mxu0 0
    %870 = vmatprep.subr.bf16.mxu0 0
    %871 = vmatpush2.bf16.xpose.msra.mxu0 0
    %872 = vmatprep.mubr.bf16.mxu0 0
    %873 = vmatmul.mubr.bf16.gmra.mxu0 %v835
    %v874 = vpop.f32.mrf.mxu0
    %v875 = vadd.f32 0.0, %v874
    %v876 = vpop.f32.mrf.mxu0
    %v877 = vpop.f32.mrf.mxu0
    %v878 = vadd.f32 0.0, %v877
    %v879 = vpop.f32.mrf.mxu0
    %880 = vdwg.mxu0
    %v881 = vmul.f32 %v875, 0.17677669
    %v882 = vmul.f32 %v878, 0.17677669
    %v883 = vadd.f32 %v881, %v406
    %v884 = vadd.f32 %v882, %v408
    %v885 = vmul.f32 %v883, 1.442695
    %v886 = vpow.pop %v885
    %v887 = vmul.f32 %v884, 1.442695
    %v888 = vpow.pop %v887
    %v889 = vsel %vm417, %v886, 0.0
    %890 = vadd.xlane.f32.xlu0 %v889
    %v891 = vpop.xlane.xlu0 %890
    %v892 = vsel %vm417, %v888, 0.0
    %893 = vadd.xlane.f32.xlu0 %v892
    %v894 = vpop.xlane.xlu0 %893
    %v895 = vrcp.pop %v891
    %v896 = vrcp.pop %v894
    %v897 = vmul.f32 %v886, %v895
    %v898 = vmul.f32 %v888, %v896
    %v899 = vpack.c.bf16 %v898, %v897
    %900 = vrot.lane.b32.xlu0 %v830, 64
    %v901 = vpop.permute.xlu0 %900
    %v904 = vsel %vm417, %v899, 0
    %906 = vmatprep.subr.bf16.mxu0 0
    %907 = vmatpush1.bf16.msra.mxu0 0
    %908 = vmatprep.subr.bf16.mxu0 0
    %909 = vmatpush1.bf16.msra.mxu0 0
    %910 = vmatprep.subr.bf16.mxu0 0
    %911 = vmatpush1.bf16.msra.mxu0 0
    %912 = vmatprep.subr.bf16.mxu0 0
    %913 = vmatpush1.bf16.msra.mxu0 0
    %914 = vmatprep.subr.bf16.mxu0 0
    %915 = vmatpush1.bf16.msra.mxu0 0
    %916 = vmatprep.subr.bf16.mxu0 0
    %917 = vmatpush1.bf16.msra.mxu0 0
    %918 = vmatprep.subr.bf16.mxu0 0
    %919 = vmatpush1.bf16.msra.mxu0 0
    %920 = vmatprep.subr.bf16.mxu0 0
    %921 = vmatpush1.bf16.msra.mxu0 %v901
    %922 = vmatprep.subr.bf16.mxu0 0
    %923 = vmatpush2.bf16.msra.mxu0 0
    %924 = vmatprep.subr.bf16.mxu0 0
    %925 = vmatpush2.bf16.msra.mxu0 0
    %926 = vmatprep.subr.bf16.mxu0 0
    %927 = vmatpush2.bf16.msra.mxu0 0
    %928 = vmatprep.subr.bf16.mxu0 0
    %929 = vmatpush2.bf16.msra.mxu0 0
    %930 = vmatprep.subr.bf16.mxu0 0
    %931 = vmatpush2.bf16.msra.mxu0 0
    %932 = vmatprep.subr.bf16.mxu0 0
    %933 = vmatpush2.bf16.msra.mxu0 0
    %934 = vmatprep.subr.bf16.mxu0 0
    %935 = vmatpush2.bf16.msra.mxu0 0
    %936 = vmatprep.subr.bf16.mxu0 0
    %937 = vmatpush2.bf16.msra.mxu0 0
    %938 = vmatprep.mubr.bf16.mxu0 0
    %939 = vmatmul.mubr.bf16.gmra.mxu0 %v904
    %v940 = vpop.f32.mrf.mxu0
    %v941 = vadd.f32 0.0, %v940
    %v942 = vpop.f32.mrf.mxu0
    %v943 = vpop.f32.mrf.mxu0
    %v944 = vadd.f32 0.0, %v943
    %v945 = vpop.f32.mrf.mxu0
    %946 = vdwg.mxu0
    %v947 = vpack.c.bf16 %v944, %v941
    %v952 = vunpack.c.l.b16 %v752
    %v953 = vunpack.c.l.b16 %v753
    %v954 = vunpack.c.l.b16 %v754
    %v955 = vunpack.c.l.b16 %v755
    %v956 = vpack.c.b16 %v953, %v952
    %v957 = vpack.c.b16 %v955, %v954
    %v961 = vsel %vm191, %v947, 0
    %963 = vmatprep.subr.bf16.mxu0 0
    %964 = vmatpush1.bf16.msra.mxu0 0
    %965 = vmatprep.subr.bf16.mxu0 0
    %966 = vmatpush1.bf16.msra.mxu0 0
    %967 = vmatprep.subr.bf16.mxu0 0
    %968 = vmatpush1.bf16.msra.mxu0 0
    %969 = vmatprep.subr.bf16.mxu0 0
    %970 = vmatpush1.bf16.msra.mxu0 0
    %971 = vmatprep.subr.bf16.mxu0 0
    %972 = vmatpush1.bf16.msra.mxu0 0
    %973 = vmatprep.subr.bf16.mxu0 0
    %974 = vmatpush1.bf16.msra.mxu0 0
    %975 = vmatprep.subr.bf16.mxu0 0
    %976 = vmatpush1.bf16.msra.mxu0 %v957
    %977 = vmatprep.subr.bf16.mxu0 0
    %978 = vmatpush1.bf16.msra.mxu0 %v956
    %979 = vmatprep.subr.bf16.mxu0 0
    %980 = vmatpush2.bf16.msra.mxu0 0
    %981 = vmatprep.subr.bf16.mxu0 0
    %982 = vmatpush2.bf16.msra.mxu0 0
    %983 = vmatprep.subr.bf16.mxu0 0
    %984 = vmatpush2.bf16.msra.mxu0 0
    %985 = vmatprep.subr.bf16.mxu0 0
    %986 = vmatpush2.bf16.msra.mxu0 0
    %987 = vmatprep.subr.bf16.mxu0 0
    %988 = vmatpush2.bf16.msra.mxu0 0
    %989 = vmatprep.subr.bf16.mxu0 0
    %990 = vmatpush2.bf16.msra.mxu0 0
    %991 = vmatprep.subr.bf16.mxu0 0
    %992 = vmatpush2.bf16.msra.mxu0 0
    %993 = vmatprep.subr.bf16.mxu0 0
    %994 = vmatpush2.bf16.msra.mxu0 0
    %995 = vmatprep.mubr.bf16.mxu0 0
    %996 = vmatmul.mubr.bf16.gmra.mxu0 %v961
    %v997 = vpop.f32.mrf.mxu0
    %v998 = vadd.f32 %v767, %v997
    %v999 = vpop.f32.mrf.mxu0
    %v1000 = vpop.f32.mrf.mxu0
    %v1001 = vadd.f32 %v771, %v1000
    %v1002 = vpop.f32.mrf.mxu0
    %1003 = vdwg.mxu0
    %v1004 = vadd.f32 %v745, %v998
    %v1005 = vadd.f32 %v746, %v1001
    %v1006 = vsel %vm191, %v1004, 0.0
    %1007 = vadd.xlane.f32.xlu0 %v1006
    %v1008 = vpop.xlane.xlu0 %1007
    %v1009 = vsel %vm191, %v1005, 0.0
    %1010 = vadd.xlane.f32.xlu0 %v1009
    %v1011 = vpop.xlane.xlu0 %1010
    %v1012 = vmul.f32 %v1008, %v541
    %v1013 = vmul.f32 %v1011, %v541
    %v1014 = vmul.f32 %v1004, %v1004
    %v1015 = vmul.f32 %v1005, %v1005
    %v1016 = vsel %vm191, %v1014, 0.0
    %1017 = vadd.xlane.f32.xlu0 %v1016
    %v1018 = vpop.xlane.xlu0 %1017
    %v1019 = vsel %vm191, %v1015, 0.0
    %1020 = vadd.xlane.f32.xlu0 %v1019
    %v1021 = vpop.xlane.xlu0 %1020
    %v1022 = vmul.f32 %v1018, %v541
    %v1023 = vmul.f32 %v1021, %v541
    %v1024 = vsub.f32 %v1004, %v1012
    %v1025 = vsub.f32 %v1005, %v1013
    %v1026 = vmul.f32 %v1012, %v1012
    %v1027 = vmul.f32 %v1013, %v1013
    %v1028 = vsub.f32 %v1022, %v1026
    %v1029 = vsub.f32 %v1023, %v1027
    %v1030 = vadd.f32 %v1028, 1e-05
    %v1031 = vadd.f32 %v1029, 1e-05
    %v1032 = vrsqrt.pop %v1030
    %v1033 = vrsqrt.pop %v1031
    %v1034 = vmul.f32 %v1024, %v1032
    %v1035 = vmul.f32 %v1025, %v1033
    %1038 = vrot.lane.b32.xlu0 %v767, 64
    %v1039 = vpop.permute.xlu0 %1038
    %1040 = vrot.lane.b32.xlu0 %v771, 64
    %v1041 = vpop.permute.xlu0 %1040
    %v1044 = vmul.f32 %v1034, %v1039
    %v1045 = vmul.f32 %v1035, %v1041
    %1046 = vrot.lane.b32.xlu0 %v767, 32
    %v1047 = vpop.permute.xlu0 %1046
    %1048 = vrot.lane.b32.xlu0 %v771, 32
    %v1049 = vpop.permute.xlu0 %1048
    %v1052 = vadd.f32 %v1044, %v1047
    %v1053 = vadd.f32 %v1045, %v1049
    %v1054 = vpack.c.bf16 %v1053, %v1052
    %v1059 = vunpack.c.l.b16 %v756
    %v1060 = vunpack.c.l.b16 %v757
    %v1061 = vunpack.c.l.b16 %v758
    %v1062 = vunpack.c.l.b16 %v759
    %v1063 = vpack.c.b16 %v1060, %v1059
    %v1064 = vpack.c.b16 %v1062, %v1061
    %v1068 = vsel %vm191, %v1054, 0
    %1070 = vmatprep.subr.bf16.mxu0 0
    %1071 = vmatpush1.bf16.msra.mxu0 0
    %1072 = vmatprep.subr.bf16.mxu0 0
    %1073 = vmatpush1.bf16.msra.mxu0 0
    %1074 = vmatprep.subr.bf16.mxu0 0
    %1075 = vmatpush1.bf16.msra.mxu0 0
    %1076 = vmatprep.subr.bf16.mxu0 0
    %1077 = vmatpush1.bf16.msra.mxu0 0
    %1078 = vmatprep.subr.bf16.mxu0 0
    %1079 = vmatpush1.bf16.msra.mxu0 0
    %1080 = vmatprep.subr.bf16.mxu0 0
    %1081 = vmatpush1.bf16.msra.mxu0 0
    %1082 = vmatprep.subr.bf16.mxu0 0
    %1083 = vmatpush1.bf16.msra.mxu0 %v1064
    %1084 = vmatprep.subr.bf16.mxu0 0
    %1085 = vmatpush1.bf16.msra.mxu0 %v1063
    %1086 = vmatprep.subr.bf16.mxu0 0
    %1087 = vmatpush2.bf16.msra.mxu0 0
    %1088 = vmatprep.subr.bf16.mxu0 0
    %1089 = vmatpush2.bf16.msra.mxu0 0
    %1090 = vmatprep.subr.bf16.mxu0 0
    %1091 = vmatpush2.bf16.msra.mxu0 0
    %1092 = vmatprep.subr.bf16.mxu0 0
    %1093 = vmatpush2.bf16.msra.mxu0 0
    %1094 = vmatprep.subr.bf16.mxu0 0
    %1095 = vmatpush2.bf16.msra.mxu0 0
    %1096 = vmatprep.subr.bf16.mxu0 0
    %1097 = vmatpush2.bf16.msra.mxu0 0
    %1098 = vmatprep.subr.bf16.mxu0 0
    %1099 = vmatpush2.bf16.msra.mxu0 0
    %1100 = vmatprep.subr.bf16.mxu0 0
    %1101 = vmatpush2.bf16.msra.mxu0 0
    %1102 = vmatprep.mubr.bf16.mxu0 0
    %1103 = vmatmul.mubr.bf16.gmra.mxu0 %v1068
    %v1104 = vpop.f32.mrf.mxu0
    %v1105 = vadd.f32 %v766, %v1104
    %v1106 = vpop.f32.mrf.mxu0
    %v1107 = vpop.f32.mrf.mxu0
    %v1108 = vadd.f32 %v770, %v1107
    %v1109 = vpop.f32.mrf.mxu0
    %1110 = vdwg.mxu0
    %v1111 = vmax.f32 %v1105, 0.0
    %v1112 = vmax.f32 %v1108, 0.0
    %v1113 = vpack.c.bf16 %v1112, %v1111
    %v1118 = vunpack.c.l.b16 %v760
    %v1119 = vunpack.c.l.b16 %v761
    %v1120 = vunpack.c.l.b16 %v762
    %v1121 = vunpack.c.l.b16 %v763
    %v1122 = vpack.c.b16 %v1119, %v1118
    %v1123 = vpack.c.b16 %v1121, %v1120
    %1126 = vrot.lane.b32.xlu0 %v767, 96
    %v1127 = vpop.permute.xlu0 %1126
    %1128 = vrot.lane.b32.xlu0 %v771, 96
    %v1129 = vpop.permute.xlu0 %1128
    %1132 = vmatprep.subr.bf16.mxu0 0
    %1133 = vmatpush1.bf16.xpose.msra.mxu0 0
    %1134 = vmatprep.subr.bf16.mxu0 0
    %1135 = vmatpush1.bf16.xpose.msra.mxu0 0
    %1136 = vmatprep.subr.bf16.mxu0 0
    %1137 = vmatpush1.bf16.xpose.msra.mxu0 0
    %1138 = vmatprep.subr.bf16.mxu0 0
    %1139 = vmatpush1.bf16.xpose.msra.mxu0 0
    %1140 = vmatprep.subr.bf16.mxu0 0
    %1141 = vmatpush1.bf16.xpose.msra.mxu0 0
    %1142 = vmatprep.subr.bf16.mxu0 0
    %1143 = vmatpush1.bf16.xpose.msra.mxu0 0
    %1144 = vmatprep.subr.bf16.mxu0 0
    %1145 = vmatpush1.bf16.xpose.msra.mxu0 %v1123
    %1146 = vmatprep.subr.bf16.mxu0 0
    %1147 = vmatpush1.bf16.xpose.msra.mxu0 %v1122
    %1148 = vmatprep.subr.bf16.mxu0 0
    %1149 = vmatpush2.bf16.xpose.msra.mxu0 0
    %1150 = vmatprep.subr.bf16.mxu0 0
    %1151 = vmatpush2.bf16.xpose.msra.mxu0 0
    %1152 = vmatprep.subr.bf16.mxu0 0
    %1153 = vmatpush2.bf16.xpose.msra.mxu0 0
    %1154 = vmatprep.subr.bf16.mxu0 0
    %1155 = vmatpush2.bf16.xpose.msra.mxu0 0
    %1156 = vmatprep.subr.bf16.mxu0 0
    %1157 = vmatpush2.bf16.xpose.msra.mxu0 0
    %1158 = vmatprep.subr.bf16.mxu0 0
    %1159 = vmatpush2.bf16.xpose.msra.mxu0 0
    %1160 = vmatprep.subr.bf16.mxu0 0
    %1161 = vmatpush2.bf16.xpose.msra.mxu0 0
    %1162 = vmatprep.subr.bf16.mxu0 0
    %1163 = vmatpush2.bf16.xpose.msra.mxu0 0
    %1164 = vmatprep.mubr.bf16.mxu0 0
    %1165 = vmatmul.mubr.bf16.gmra.mxu0 %v1113
    %v1166 = vpop.f32.mrf.mxu0
    %v1167 = vadd.f32 %v1127, %v1166
    %v1168 = vpop.f32.mrf.mxu0
    %v1169 = vpop.f32.mrf.mxu0
    %v1170 = vadd.f32 %v1129, %v1169
    %v1171 = vpop.f32.mrf.mxu0
    %1172 = vdwg.mxu0
    %v1173 = vadd.f32 %v1052, %v1167
    %v1174 = vadd.f32 %v1053, %v1170
    %v1175 = vsel %vm191, %v1173, 0.0
    %1176 = vadd.xlane.f32.xlu0 %v1175
    %v1177 = vpop.xlane.xlu0 %1176
    %v1178 = vsel %vm191, %v1174, 0.0
    %1179 = vadd.xlane.f32.xlu0 %v1178
    %v1180 = vpop.xlane.xlu0 %1179
    %v1181 = vmul.f32 %v1177, %v541
    %v1182 = vmul.f32 %v1180, %v541
    %v1183 = vmul.f32 %v1173, %v1173
    %v1184 = vmul.f32 %v1174, %v1174
    %v1185 = vsel %vm191, %v1183, 0.0
    %1186 = vadd.xlane.f32.xlu0 %v1185
    %v1187 = vpop.xlane.xlu0 %1186
    %v1188 = vsel %vm191, %v1184, 0.0
    %1189 = vadd.xlane.f32.xlu0 %v1188
    %v1190 = vpop.xlane.xlu0 %1189
    %v1191 = vmul.f32 %v1187, %v541
    %v1192 = vmul.f32 %v1190, %v541
    %v1193 = vsub.f32 %v1173, %v1181
    %v1194 = vsub.f32 %v1174, %v1182
    %v1195 = vmul.f32 %v1181, %v1181
    %v1196 = vmul.f32 %v1182, %v1182
    %v1197 = vsub.f32 %v1191, %v1195
    %v1198 = vsub.f32 %v1192, %v1196
    %v1199 = vadd.f32 %v1197, 1e-05
    %v1200 = vadd.f32 %v1198, 1e-05
    %v1201 = vrsqrt.pop %v1199
    %v1202 = vrsqrt.pop %v1200
    %v1203 = vmul.f32 %v1193, %v1201
    %v1204 = vmul.f32 %v1194, %v1202
    %v1205 = vmul.f32 %v1203, %v768
    %v1206 = vmul.f32 %v1204, %v772
    %1209 = vrot.lane.b32.xlu0 %v768, 96
    %v1210 = vpop.permute.xlu0 %1209
    %1211 = vrot.lane.b32.xlu0 %v772, 96
    %v1212 = vpop.permute.xlu0 %1211
    %v1215 = vadd.f32 %v1205, %v1210
    %v1216 = vadd.f32 %v1206, %v1212
    %v1217 = vsel %vm191, %v1215, 0.0
    %1218 = vadd.xlane.f32.xlu0 %v1217
    %v1219 = vpop.xlane.xlu0 %1218
    %v1220 = vsel %vm191, %v1216, 0.0
    %1221 = vadd.xlane.f32.xlu0 %v1220
    %v1222 = vpop.xlane.xlu0 %1221
    %v1223 = vmul.f32 %v1219, %v541
    %v1224 = vmul.f32 %v1222, %v541
    %v1225 = vmul.f32 %v1215, %v1215
    %v1226 = vmul.f32 %v1216, %v1216
    %v1227 = vsel %vm191, %v1225, 0.0
    %1228 = vadd.xlane.f32.xlu0 %v1227
    %v1229 = vpop.xlane.xlu0 %1228
    %v1230 = vsel %vm191, %v1226, 0.0
    %1231 = vadd.xlane.f32.xlu0 %v1230
    %v1232 = vpop.xlane.xlu0 %1231
    %v1233 = vmul.f32 %v1229, %v541
    %v1234 = vmul.f32 %v1232, %v541
    %v1235 = vsub.f32 %v1215, %v1223
    %v1236 = vsub.f32 %v1216, %v1224
    %v1237 = vmul.f32 %v1223, %v1223
    %v1238 = vmul.f32 %v1224, %v1224
    %v1239 = vsub.f32 %v1233, %v1237
    %v1240 = vsub.f32 %v1234, %v1238
    %v1241 = vadd.f32 %v1239, 1e-05
    %v1242 = vadd.f32 %v1240, 1e-05
    %v1243 = vrsqrt.pop %v1241
    %v1244 = vrsqrt.pop %v1242
    %v1245 = vmul.f32 %v1235, %v1243
    %v1246 = vmul.f32 %v1236, %v1244
    %v1247 = vmul.f32 %v1245, %v52
    %v1248 = vmul.f32 %v1246, %v54
    %1251 = vrot.lane.b32.xlu0 %v52, 96
    %v1252 = vpop.permute.xlu0 %1251
    %1253 = vrot.lane.b32.xlu0 %v54, 96
    %v1254 = vpop.permute.xlu0 %1253
    %v1257 = vadd.f32 %v1247, %v1252
    %v1258 = vadd.f32 %v1248, %v1254
    %1259 = vst.msk [vmem:[#allocation7] sm:$0xff] %vm191, %v1257
    %1260 = vst.msk [vmem:[#allocation7 + $0x8] sm:$0xff] %vm191, %v1258
    // Predicated region
    $region26: #{wavelet_forward.1} parent=1 // pred_check
      _
    $region27: #{wavelet_forward.1} parent=1 // pred_check_branch
      %1262 = sbr.rel (0) target = $region29
    $region28: #{wavelet_forward.1} parent=1 // pred_region
      %s1264 = ssub.s32 256, 256
      %1265 = vsyncadd [#allocation4], %s1264
      %s1266 = sshll.u32 [#allocation7], 4
      %s1267 = int_to_ptr.vmem [resolvable:$true] %s1266
      %1272 = dma.vmem_to_hbm [thread:$0]  %s1267, 256, %s4, [#allocation4], 128, 128, 8
    $region29: #{wavelet_forward.1} parent=1 // pred_fallthru
      _
    // Predicated region
    $region30: #{wavelet_forward.1} parent=1 // pred_check
      _
    $region31: #{wavelet_forward.1} parent=1 // pred_check_branch
      %1274 = sbr.rel (0) target = $region33
    $region32: #{wavelet_forward.1} parent=1 // pred_region
      %1275 = dma.done [#allocation4], 256
    $region33: #{wavelet_forward.1} parent=1 // pred_fallthru
      _
    %1276 = vsyncpa [#allocation3], 1
    %1277 = vsyncpa [#allocation6], 1
    %1278 = vsyncpa [#allocation4], 1

</llo_original>
